<compile_context>
chip_gen: v6e
topology: v6e:2x2x1
jax: 0.10.0
libtpu: 0.0.40
codegen_flags: <defaults>
</compile_context>

<pallas_src>
import functools

import jax
import jax.numpy as jnp
from jax import lax
from jax.experimental import pallas as pl
from jax.experimental.pallas import tpu as pltpu


def _ceil_to(v, m):
    return ((v + m - 1) // m) * m


def _mish(v):
    # mish(x) = x * tanh(softplus(x)) = x * w(w+2) / (w(w+2)+2), w = e^x.
    # Clamp the exp argument; for x > 20 the factor rounds to 1.0 in f32.
    w = jnp.exp(jnp.minimum(v, 20.0))
    n = w * (w + 2.0)
    return v * (n * pl.reciprocal(n + 2.0, approx=True))


def _chi_res_block_kernel(
    x_ref,       # (Bb, T, Cin_p)   zero-padded input, channels-last, f32
    emb_ref,     # (Bb, 1, E)
    *rest,       # w1, w2, [wr], wl, gmat, gmatT, par, o_ref
    Bb, T, K, n_norm, cond_predict_scale, use_res_conv, eps,
):
    it = iter(rest)
    w1_ref = next(it)                                # (K*Cin_p, Cout_p)  bf16
    w2_ref = next(it)                                # (K*Cout_p, Cout_p) bf16
    wr_ref = next(it) if use_res_conv else None      # (Cin_p, Cout_p)    bf16
    wl_ref = next(it)                                # (E, cm*Cout_p)     bf16
    gmat_ref = next(it)                              # (Cout_p, G)        f32
    gmatT_ref = next(it)                             # (G, Cout_p)        f32
    par_ref = next(it)                               # (9, Cout_p)        f32
    o_ref = next(it)                                 # (Bb, T, Cout_p)    f32

    pad = K // 2
    BbT = Bb * T
    Cp = o_ref.shape[-1]
    Cin_p = x_ref.shape[-1]

    par = par_ref[...]
    b1, g1, be1 = par[0:1], par[1:2], par[2:3]
    b2, g2, be2 = par[3:4], par[4:5], par[5:6]
    bls, blb, br = par[6:7], par[7:8], par[8:9]

    gmat = gmat_ref[...]
    gmat_t = gmatT_ref[...]
    inv_n = 1.0 / n_norm

    # 1-lane time-index column for boundary masks (cheap vs. full-width iota).
    t_col = lax.broadcasted_iota(jnp.int32, (Bb, T, 1), 1).reshape(BbT, 1)

    def taps(h2d):
        """K boundary-masked shifted copies concatenated along channels (bf16)."""
        cols = []
        for k in range(K):
            s = k - pad
            if s == 0:
                cols.append(h2d.astype(jnp.bfloat16))
                continue
            rolled = pltpu.roll(h2d, shift=(-s) % BbT, axis=0)  # rolled[r] = h2d[r+s]
            mask = (t_col < T - s) if s > 0 else (t_col >= -s)  # zero-pad boundary
            cols.append((rolled * mask.astype(h2d.dtype)).astype(jnp.bfloat16))
        return jnp.concatenate(cols, axis=-1)

    def group_norm(h2d, gamma, beta):
        # Per-(batch, group) statistics via the one-hot gmat; padded channels
        # have zero weight so they do not perturb real groups.  Stats in f32.
        h3 = h2d.reshape(Bb, T, Cp)
        s1 = jnp.sum(h3, axis=1)                                    # (Bb, Cp)
        s2 = jnp.sum(h3 * h3, axis=1)
        g12 = jnp.dot(jnp.concatenate([s1, s2], axis=0), gmat,
                      preferred_element_type=jnp.float32) * inv_n   # (2Bb, G)
        mean_g, ex2_g = g12[:Bb], g12[Bb:]
        var_g = jnp.maximum(ex2_g - mean_g * mean_g, 0.0)           # clamp >= 0
        mv = jnp.dot(jnp.concatenate([mean_g, var_g], axis=0), gmat_t,
                     preferred_element_type=jnp.float32)            # (2Bb, Cp)
        mean_c, var_c = mv[:Bb], mv[Bb:]
        sc = lax.rsqrt(var_c + eps) * gamma                         # (Bb, Cp)
        off = beta - mean_c * sc
        return (h3 * sc[:, None, :] + off[:, None, :]).reshape(BbT, Cp)

    # ---- conv1: in-kernel taps -> ONE (BbT, K*Cin_p) x (K*Cin_p, Cp) matmul ----
    x2d = x_ref[...].reshape(BbT, Cin_p)
    h = jnp.dot(taps(x2d), w1_ref[...], preferred_element_type=jnp.float32) + b1
    h = _mish(group_norm(h, g1, be1))

    # ---- cond_encoder: Mish -> single fused Linear, then FiLM ----
    e = _mish(emb_ref[...][:, 0, :]).astype(jnp.bfloat16)           # (Bb, E)
    cond = jnp.dot(e, wl_ref[...], preferred_element_type=jnp.float32)
    h3 = h.reshape(Bb, T, Cp)
    if cond_predict_scale:
        scale = cond[:, :Cp] + bls
        bias = cond[:, Cp:] + blb
        h = (h3 * scale[:, None, :] + bias[:, None, :]).reshape(BbT, Cp)
    else:
        h = (h3 + (cond + bls)[:, None, :]).reshape(BbT, Cp)

    # ---- conv2: same tap trick, single matmul ----
    h2 = jnp.dot(taps(h), w2_ref[...], preferred_element_type=jnp.float32) + b2
    h2 = _mish(group_norm(h2, g2, be2))

    # ---- residual: the centre tap is x itself ----
    if use_res_conv:
        res = jnp.dot(x2d.astype(jnp.bfloat16), wr_ref[...],
                      preferred_element_type=jnp.float32) + br
    else:
        res = x2d
    o_ref[...] = (h2 + res).reshape(Bb, T, Cp)


def chi_residual_block(x_ncw, emb, kp, *, kernel_size=3, cond_predict_scale=False):
    """x_ncw: (B, Cin, T) f32 (NCW like PyTorch), emb: (B, E) f32 -> (B, Cout, T)."""
    B, Cin, T = x_ncw.shape
    E = emb.shape[-1]
    K = kernel_size
    Cout = kp["out_dim"]
    G = kp["groups"]
    Cout_p = kp["par"].shape[-1]
    Cin_p = kp["cin_p"]
    use_res_conv = Cin != Cout

    # (Bb,T,C) <-> (Bb*T,C) reshapes in the kernel are only free when T % 8 == 0.
    # TODO(synk): support ragged T by masking padded timesteps out of the
    # GroupNorm statistics and conv boundary masks.
    assert T % 8 == 0, "chi_residual_block requires T to be a multiple of 8"

    # Channels-last, lane-dense channel padding (glue).
    x_tc = jnp.transpose(x_ncw, (0, 2, 1)).astype(jnp.float32)       # (B, T, Cin)
    x_tc = jnp.pad(x_tc, ((0, 0), (0, 0), (0, Cin_p - Cin)))         # (B, T, Cin_p)
    emb3 = emb.astype(jnp.float32)[:, None, :]                       # (B, 1, E)

    # Fold a block of Bb batch elements into each grid step (target ~512 rows),
    # but keep >= 2 grid steps when B > 1 so megacore can shard the batch axis.
    Bb = max(1, min(B, 512 // max(T, 1)))
    nb = -(-B // Bb)
    if nb == 1 and B > 1:
        Bb = -(-B // 2)
        nb = -(-B // Bb)
    B_pad = nb * Bb
    if B_pad != B:
        x_tc = jnp.pad(x_tc, ((0, B_pad - B), (0, 0), (0, 0)))
        emb3 = jnp.pad(emb3, ((0, B_pad - B), (0, 0), (0, 0)))

    # Only ship live weights (no zero placeholders).
    weights = [kp["w1"], kp["w2"]]
    if use_res_conv:
        weights.append(kp["wr"])
    weights += [kp["wl"], kp["gmat"], kp["gmatT"], kp["par"]]

    kern = functools.partial(
        _chi_res_block_kernel,
        Bb=Bb, T=T, K=K, n_norm=float(T * (Cout // G)),
        cond_predict_scale=cond_predict_scale,
        use_res_conv=use_res_conv, eps=1e-5)

    def w_spec(arr):
        zeros = (0,) * arr.ndim
        # Grid-invariant weights: single-buffered to halve resident weight VMEM.
        return pl.BlockSpec(arr.shape, lambda i, z=zeros: z,
                            pipeline_mode=pl.Buffered(1))

    in_specs = [
        pl.BlockSpec((Bb, T, Cin_p), lambda i: (i, 0, 0)),
        pl.BlockSpec((Bb, 1, E), lambda i: (i, 0, 0)),
    ] + [w_spec(w) for w in weights]
    out_spec = pl.BlockSpec((Bb, T, Cout_p), lambda i: (i, 0, 0))

    # VMEM budget derived from the actual resident buffers (+ intermediates).
    blk_bytes = 2 * (Bb * T * Cin_p + Bb * E + Bb * T * Cout_p) * 4   # double-buffered I/O
    w_bytes = sum(int(w.size) * w.dtype.itemsize for w in weights)    # single-buffered
    interm = Bb * T * K * (Cin_p + Cout_p) * 2 + 6 * Bb * T * Cout_p * 4
    vmem_limit = int(min(max(2 * (blk_bytes + w_bytes + interm), 16 << 20), 64 << 20))

    out = pl.pallas_call(
        kern,
        out_shape=jax.ShapeDtypeStruct((B_pad, T, Cout_p), jnp.float32),
        grid_spec=pltpu.PrefetchScalarGridSpec(
            num_scalar_prefetch=0,
            grid=(nb,),
            in_specs=in_specs,
            out_specs=out_spec,
        ),
        compiler_params=pltpu.CompilerParams(
            dimension_semantics=("parallel",),
            vmem_limit_bytes=vmem_limit),
    )(x_tc, emb3, *weights)

    return jnp.transpose(out[:B, :, :Cout], (0, 2, 1))                # back to NCW


def init_params(key, in_dim, out_dim, emb_dim, kernel_size, cond_predict_scale):
    """Deterministic synthetic parameters.

    Returns (torch_layout_params, padded_kernel_layout_params)."""
    K = kernel_size
    G = min(8, out_dim // 4)                   # GroupNorm1d(out_dim, 8, 4)
    cond_dim = 2 * out_dim if cond_predict_scale else out_dim
    use_res_conv = in_dim != out_dim
    ks = jax.random.split(key, 12)

    def nrm(k, shape, scale=0.1):
        return (scale * jax.random.normal(k, shape)).astype(jnp.float32)

    tp = {
        "w1": nrm(ks[0], (out_dim, in_dim, K)),
        "b1": nrm(ks[1], (out_dim,)),
        "g1": 1.0 + nrm(ks[2], (out_dim,)),
        "be1": nrm(ks[3], (out_dim,)),
        "w2": nrm(ks[4], (out_dim, out_dim, K)),
        "b2": nrm(ks[5], (out_dim,)),
        "g2": 1.0 + nrm(ks[6], (out_dim,)),
        "be2": nrm(ks[7], (out_dim,)),
        "wl": nrm(ks[8], (cond_dim, emb_dim)),
        "bl": nrm(ks[9], (cond_dim,)),
        "wr": nrm(ks[10], (out_dim, in_dim, 1)),
        "br": nrm(ks[11], (out_dim,)),
    }

    Cin_p = _ceil_to(in_dim, 128)
    Cout_p = _ceil_to(out_dim, 128)

    def pad_to(a, shape):
        return jnp.pad(a, [(0, s - d) for d, s in zip(a.shape, shape)])

    # conv weights in channels-last, im2col-friendly layouts (bf16 MXU operands).
    w1 = pad_to(jnp.transpose(tp["w1"], (2, 1, 0)), (K, Cin_p, Cout_p))
    w1 = w1.reshape(K * Cin_p, Cout_p).astype(jnp.bfloat16)
    w2 = pad_to(jnp.transpose(tp["w2"], (2, 1, 0)), (K, Cout_p, Cout_p))
    w2 = w2.reshape(K * Cout_p, Cout_p).astype(jnp.bfloat16)

    if cond_predict_scale:
        wl = jnp.concatenate(
            [pad_to(tp["wl"][:out_dim].T, (emb_dim, Cout_p)),
             pad_to(tp["wl"][out_dim:].T, (emb_dim, Cout_p))], axis=1)
        bl_s, bl_b = tp["bl"][:out_dim], tp["bl"][out_dim:]
    else:
        wl = pad_to(tp["wl"].T, (emb_dim, Cout_p))
        bl_s, bl_b = tp["bl"], jnp.zeros((out_dim,), jnp.float32)
    wl = wl.astype(jnp.bfloat16)

    cpg = out_dim // G
    gmat = (jnp.arange(out_dim)[:, None] // cpg ==
            jnp.arange(G)[None, :]).astype(jnp.float32)   # (Cout, G)
    gmat = pad_to(gmat, (Cout_p, G))

    def row(v):
        return pad_to(v.astype(jnp.float32), (Cout_p,))

    br = tp["br"] if use_res_conv else jnp.zeros((out_dim,), jnp.float32)
    par = jnp.stack([row(tp["b1"]), row(tp["g1"]), row(tp["be1"]),
                     row(tp["b2"]), row(tp["g2"]), row(tp["be2"]),
                     row(bl_s), row(bl_b), row(br)], axis=0)   # (9, Cout_p)

    kp = {
        "w1": w1,
        "w2": w2,
        "wl": wl,
        "gmat": gmat,
        "gmatT": gmat.T,
        "par": par,
        "out_dim": out_dim,
        "groups": G,
        "cin_p": Cin_p,
    }
    if use_res_conv:
        kp["wr"] = pad_to(tp["wr"][:, :, 0].T, (Cin_p, Cout_p)).astype(jnp.bfloat16)
    return tp, kp


def ref_forward(x, emb, tp, *, cond_predict_scale, out_dim, groups, kernel_size=3):
    """Pure-JAX reference mirroring the PyTorch module in NCW layout (f32)."""
    eps = 1e-5
    hp = lax.Precision.HIGHEST
    pad = kernel_size // 2

    def conv1d(v, w, b, padding):
        out = lax.conv_general_dilated(
            v, w, window_strides=(1,), padding=[(padding, padding)],
            dimension_numbers=("NCH", "OIH", "NCH"), precision=hp)
        return out + b[None, :, None]

    def gn(v, gamma, beta):
        B, C, T = v.shape
        vg = v.reshape(B, groups, (C // groups) * T)
        mean = vg.mean(axis=-1, keepdims=True)
        var = ((vg - mean) ** 2).mean(axis=-1, keepdims=True)
        vn = ((vg - mean) / jnp.sqrt(var + eps)).reshape(B, C, T)
        return vn * gamma[None, :, None] + beta[None, :, None]

    def mish(v):
        return v * jnp.tanh(jax.nn.softplus(v))

    h = mish(gn(conv1d(x, tp["w1"], tp["b1"], pad), tp["g1"], tp["be1"]))
    e = jnp.dot(mish(emb), tp["wl"].T, precision=hp) + tp["bl"]
    if cond_predict_scale:
        e = e.reshape(e.shape[0], 2, out_dim, 1)
        h = e[:, 0] * h + e[:, 1]
    else:
        h = h + e[:, :, None]
    h = mish(gn(conv1d(h, tp["w2"], tp["b2"], pad), tp["g2"], tp["be2"]))
    if x.shape[1] != out_dim:
        res = conv1d(x, tp["wr"], tp["br"], 0)
    else:
        res = x
    return h + res


if __name__ == "__main__":
    B, in_dim, out_dim, emb_dim, T, K = 2, 8, 16, 32, 16, 3
    cond_predict_scale = True

    key = jax.random.PRNGKey(0)
    kx, ke, kparam = jax.random.split(key, 3)
    x = jax.random.normal(kx, (B, in_dim, T), jnp.float32)     # NCW like PyTorch
    emb = jax.random.normal(ke, (B, emb_dim), jnp.float32)

    tp, kp = init_params(kparam, in_dim, out_dim, emb_dim, K, cond_predict_scale)

    out = chi_residual_block(x, emb, kp, kernel_size=K,
                             cond_predict_scale=cond_predict_scale)
    out = jax.block_until_ready(out)

    ref = ref_forward(x, emb, tp, cond_predict_scale=cond_predict_scale,
                      out_dim=out_dim, groups=min(8, out_dim // 4),
                      kernel_size=K)

    assert out.shape == (B, out_dim, T)
    err = float(jnp.max(jnp.abs(out - ref)))
    # bf16 MXU operands (f32 accumulation) -> relaxed tolerance vs. the pure-f32 ref.
    if err < 5e-2:
        print("KERNEL_OK")
    else:
        print(f"MISMATCH max_abs_err={err}")
</pallas_src>

<mosaic_0001>
module attributes {stable_mosaic.version = 11 : i64} {
  func.func @_chi_res_block_kernel(%arg0: i32, %arg1: memref<1x16x128xf32, #tpu.memory_space<vmem>>, %arg2: memref<1x1x32xf32, #tpu.memory_space<vmem>>, %arg3: memref<384x128xbf16, #tpu.memory_space<vmem>>, %arg4: memref<384x128xbf16, #tpu.memory_space<vmem>>, %arg5: memref<128x128xbf16, #tpu.memory_space<vmem>>, %arg6: memref<32x256xbf16, #tpu.memory_space<vmem>>, %arg7: memref<128x4xf32, #tpu.memory_space<vmem>>, %arg8: memref<4x128xf32, #tpu.memory_space<vmem>>, %arg9: memref<9x128xf32, #tpu.memory_space<vmem>>, %arg10: memref<1x16x128xf32, #tpu.memory_space<vmem>>) attributes {dimension_semantics = [#tpu.dimension_semantics<parallel>], iteration_bounds = array<i64: 2>, scalar_prefetch = 0 : i64, scratch_operands = 0 : i64, tpu.core_type = #tpu.core_type<tc>, window_params = [{transform_indices = @transform_0, window_bounds = array<i64: 1, 16, 128>}, {transform_indices = @transform_1, window_bounds = array<i64: 1, 1, 32>}, {pipeline_mode = #tpu.pipeline_mode<synchronous>, transform_indices = @transform_2, window_bounds = array<i64: 384, 128>}, {pipeline_mode = #tpu.pipeline_mode<synchronous>, transform_indices = @transform_3, window_bounds = array<i64: 384, 128>}, {pipeline_mode = #tpu.pipeline_mode<synchronous>, transform_indices = @transform_4, window_bounds = array<i64: 128, 128>}, {pipeline_mode = #tpu.pipeline_mode<synchronous>, transform_indices = @transform_5, window_bounds = array<i64: 32, 256>}, {pipeline_mode = #tpu.pipeline_mode<synchronous>, transform_indices = @transform_6, window_bounds = array<i64: 128, 4>}, {pipeline_mode = #tpu.pipeline_mode<synchronous>, transform_indices = @transform_7, window_bounds = array<i64: 4, 128>}, {pipeline_mode = #tpu.pipeline_mode<synchronous>, transform_indices = @transform_8, window_bounds = array<i64: 9, 128>}, {transform_indices = @transform_9, window_bounds = array<i64: 1, 16, 128>}]} {
    %c0 = arith.constant 0 : index
    %c0_0 = arith.constant 0 : index
    %0 = vector.load %arg9[%c0, %c0_0] : memref<9x128xf32, #tpu.memory_space<vmem>>, vector<9x128xf32>
    %1 = vector.extract_strided_slice %0 {offsets = [0, 0], sizes = [1, 128], strides = [1, 1]} : vector<9x128xf32> to vector<1x128xf32>
    %2 = vector.extract_strided_slice %0 {offsets = [1, 0], sizes = [1, 128], strides = [1, 1]} : vector<9x128xf32> to vector<1x128xf32>
    %3 = vector.extract_strided_slice %0 {offsets = [2, 0], sizes = [1, 128], strides = [1, 1]} : vector<9x128xf32> to vector<1x128xf32>
    %4 = vector.extract_strided_slice %0 {offsets = [3, 0], sizes = [1, 128], strides = [1, 1]} : vector<9x128xf32> to vector<1x128xf32>
    %5 = vector.extract_strided_slice %0 {offsets = [4, 0], sizes = [1, 128], strides = [1, 1]} : vector<9x128xf32> to vector<1x128xf32>
    %6 = vector.extract_strided_slice %0 {offsets = [5, 0], sizes = [1, 128], strides = [1, 1]} : vector<9x128xf32> to vector<1x128xf32>
    %7 = vector.extract_strided_slice %0 {offsets = [6, 0], sizes = [1, 128], strides = [1, 1]} : vector<9x128xf32> to vector<1x128xf32>
    %8 = vector.extract_strided_slice %0 {offsets = [7, 0], sizes = [1, 128], strides = [1, 1]} : vector<9x128xf32> to vector<1x128xf32>
    %9 = vector.extract_strided_slice %0 {offsets = [8, 0], sizes = [1, 128], strides = [1, 1]} : vector<9x128xf32> to vector<1x128xf32>
    %c0_1 = arith.constant 0 : index
    %c0_2 = arith.constant 0 : index
    %10 = vector.load %arg7[%c0_1, %c0_2] : memref<128x4xf32, #tpu.memory_space<vmem>>, vector<128x4xf32>
    %c0_3 = arith.constant 0 : index
    %c0_4 = arith.constant 0 : index
    %11 = vector.load %arg8[%c0_3, %c0_4] : memref<4x128xf32, #tpu.memory_space<vmem>>, vector<4x128xf32>
    %12 = tpu.iota {dimensions = array<i32: 1>} : vector<1x16x1xi32>
    %13 = vector.shape_cast %12 : vector<1x16x1xi32> to vector<16x1xi32>
    %c0_5 = arith.constant 0 : index
    %c0_6 = arith.constant 0 : index
    %c0_7 = arith.constant 0 : index
    %14 = vector.load %arg1[%c0_5, %c0_6, %c0_7] : memref<1x16x128xf32, #tpu.memory_space<vmem>>, vector<1x16x128xf32>
    %15 = vector.shape_cast %14 : vector<1x16x128xf32> to vector<16x128xf32>
    %c1_i32 = arith.constant 1 : i32
    %16 = tpu.dynamic_rotate %15 by %c1_i32 dim 0 : vector<16x128xf32>, i32 -> vector<16x128xf32>
    %c1_i32_8 = arith.constant 1 : i32
    %17 = vector.broadcast %c1_i32_8 : i32 to vector<16x1xi32>
    %18 = arith.cmpi sge, %13, %17 : vector<16x1xi32>
    %19 = arith.extui %18 : vector<16x1xi1> to vector<16x1xi32>
    %20 = arith.sitofp %19 : vector<16x1xi32> to vector<16x1xf32>
    %21 = vector.broadcast %20 : vector<16x1xf32> to vector<16x128xf32>
    %22 = arith.mulf %16, %21 : vector<16x128xf32>
    %23 = arith.truncf %22 : vector<16x128xf32> to vector<16x128xbf16>
    %24 = arith.truncf %15 : vector<16x128xf32> to vector<16x128xbf16>
    %c15_i32 = arith.constant 15 : i32
    %25 = tpu.dynamic_rotate %15 by %c15_i32 dim 0 : vector<16x128xf32>, i32 -> vector<16x128xf32>
    %c15_i32_9 = arith.constant 15 : i32
    %26 = vector.broadcast %c15_i32_9 : i32 to vector<16x1xi32>
    %27 = arith.cmpi slt, %13, %26 : vector<16x1xi32>
    %28 = arith.extui %27 : vector<16x1xi1> to vector<16x1xi32>
    %29 = arith.sitofp %28 : vector<16x1xi32> to vector<16x1xf32>
    %30 = vector.broadcast %29 : vector<16x1xf32> to vector<16x128xf32>
    %31 = arith.mulf %25, %30 : vector<16x128xf32>
    %32 = arith.truncf %31 : vector<16x128xf32> to vector<16x128xbf16>
    %33 = tpu.concatenate %23, %24, %32 in 1 : vector<16x128xbf16>, vector<16x128xbf16>, vector<16x128xbf16> -> vector<16x384xbf16>
    %c0_10 = arith.constant 0 : index
    %c0_11 = arith.constant 0 : index
    %34 = vector.load %arg3[%c0_10, %c0_11] : memref<384x128xbf16, #tpu.memory_space<vmem>>, vector<384x128xbf16>
    %cst = arith.constant dense<0.000000e+00> : vector<16x128xf32>
    %35 = tpu.matmul %33, %34, %cst {dimension_numbers = #tpu.dot_dimension_numbers<[1], [0], [0], [1], [0, 0, 1, 1], [], []>} : vector<16x384xbf16>, vector<384x128xbf16>, vector<16x128xf32> -> vector<16x128xf32>
    %36 = vector.broadcast %1 : vector<1x128xf32> to vector<16x128xf32>
    %37 = arith.addf %35, %36 : vector<16x128xf32>
    %38 = vector.shape_cast %37 : vector<16x128xf32> to vector<1x16x128xf32>
    %cst_12 = arith.constant dense<0.000000e+00> : vector<1x128xf32>
    %39 = vector.multi_reduction <add>, %38, %cst_12 [1] : vector<1x16x128xf32> to vector<1x128xf32>
    %40 = arith.mulf %38, %38 : vector<1x16x128xf32>
    %cst_13 = arith.constant dense<0.000000e+00> : vector<1x128xf32>
    %41 = vector.multi_reduction <add>, %40, %cst_13 [1] : vector<1x16x128xf32> to vector<1x128xf32>
    %42 = tpu.concatenate %39, %41 in 0 : vector<1x128xf32>, vector<1x128xf32> -> vector<2x128xf32>
    %cst_14 = arith.constant dense<0.000000e+00> : vector<2x4xf32>
    %43 = tpu.matmul %42, %10, %cst_14 {dimension_numbers = #tpu.dot_dimension_numbers<[1], [0], [0], [1], [0, 0, 1, 1], [], []>} : vector<2x128xf32>, vector<128x4xf32>, vector<2x4xf32> -> vector<2x4xf32>
    %cst_15 = arith.constant 1.562500e-02 : f32
    %44 = vector.broadcast %cst_15 : f32 to vector<2x4xf32>
    %45 = arith.mulf %43, %44 : vector<2x4xf32>
    %46 = vector.extract_strided_slice %45 {offsets = [0, 0], sizes = [1, 4], strides = [1, 1]} : vector<2x4xf32> to vector<1x4xf32>
    %47 = vector.extract_strided_slice %45 {offsets = [1, 0], sizes = [1, 4], strides = [1, 1]} : vector<2x4xf32> to vector<1x4xf32>
    %48 = arith.mulf %46, %46 : vector<1x4xf32>
    %49 = arith.subf %47, %48 : vector<1x4xf32>
    %cst_16 = arith.constant 0.000000e+00 : f32
    %50 = vector.broadcast %cst_16 : f32 to vector<1x4xf32>
    %51 = arith.maximumf %49, %50 : vector<1x4xf32>
    %52 = tpu.concatenate %46, %51 in 0 : vector<1x4xf32>, vector<1x4xf32> -> vector<2x4xf32>
    %cst_17 = arith.constant dense<0.000000e+00> : vector<2x128xf32>
    %53 = tpu.matmul %52, %11, %cst_17 {dimension_numbers = #tpu.dot_dimension_numbers<[1], [0], [0], [1], [0, 0, 1, 1], [], []>} : vector<2x4xf32>, vector<4x128xf32>, vector<2x128xf32> -> vector<2x128xf32>
    %54 = vector.extract_strided_slice %53 {offsets = [0, 0], sizes = [1, 128], strides = [1, 1]} : vector<2x128xf32> to vector<1x128xf32>
    %55 = vector.extract_strided_slice %53 {offsets = [1, 0], sizes = [1, 128], strides = [1, 1]} : vector<2x128xf32> to vector<1x128xf32>
    %cst_18 = arith.constant 9.99999974E-6 : f32
    %56 = vector.broadcast %cst_18 : f32 to vector<1x128xf32>
    %57 = arith.addf %55, %56 : vector<1x128xf32>
    %58 = math.rsqrt %57 : vector<1x128xf32>
    %59 = arith.mulf %58, %2 : vector<1x128xf32>
    %60 = arith.mulf %54, %59 : vector<1x128xf32>
    %61 = arith.subf %3, %60 : vector<1x128xf32>
    %62 = vector.shape_cast %59 : vector<1x128xf32> to vector<1x1x128xf32>
    %63 = vector.broadcast %62 : vector<1x1x128xf32> to vector<1x16x128xf32>
    %64 = arith.mulf %38, %63 : vector<1x16x128xf32>
    %65 = vector.shape_cast %61 : vector<1x128xf32> to vector<1x1x128xf32>
    %66 = vector.broadcast %65 : vector<1x1x128xf32> to vector<1x16x128xf32>
    %67 = arith.addf %64, %66 : vector<1x16x128xf32>
    %68 = vector.shape_cast %67 : vector<1x16x128xf32> to vector<16x128xf32>
    %cst_19 = arith.constant 2.000000e+01 : f32
    %69 = vector.broadcast %cst_19 : f32 to vector<16x128xf32>
    %70 = arith.minimumf %68, %69 : vector<16x128xf32>
    %71 = math.exp %70 : vector<16x128xf32>
    %cst_20 = arith.constant 2.000000e+00 : f32
    %72 = vector.broadcast %cst_20 : f32 to vector<16x128xf32>
    %73 = arith.addf %71, %72 : vector<16x128xf32>
    %74 = arith.mulf %71, %73 : vector<16x128xf32>
    %cst_21 = arith.constant 2.000000e+00 : f32
    %75 = vector.broadcast %cst_21 : f32 to vector<16x128xf32>
    %76 = arith.addf %74, %75 : vector<16x128xf32>
    %77 = tpu.reciprocal %76 {approx = true} : vector<16x128xf32> -> vector<16x128xf32>
    %78 = arith.mulf %74, %77 : vector<16x128xf32>
    %79 = arith.mulf %68, %78 : vector<16x128xf32>
    %c0_22 = arith.constant 0 : index
    %c0_23 = arith.constant 0 : index
    %c0_24 = arith.constant 0 : index
    %80 = vector.load %arg2[%c0_22, %c0_23, %c0_24] : memref<1x1x32xf32, #tpu.memory_space<vmem>>, vector<1x1x32xf32>
    %81 = vector.shape_cast %80 : vector<1x1x32xf32> to vector<1x32xf32>
    %cst_25 = arith.constant 2.000000e+01 : f32
    %82 = vector.broadcast %cst_25 : f32 to vector<1x32xf32>
    %83 = arith.minimumf %81, %82 : vector<1x32xf32>
    %84 = math.exp %83 : vector<1x32xf32>
    %cst_26 = arith.constant 2.000000e+00 : f32
    %85 = vector.broadcast %cst_26 : f32 to vector<1x32xf32>
    %86 = arith.addf %84, %85 : vector<1x32xf32>
    %87 = arith.mulf %84, %86 : vector<1x32xf32>
    %cst_27 = arith.constant 2.000000e+00 : f32
    %88 = vector.broadcast %cst_27 : f32 to vector<1x32xf32>
    %89 = arith.addf %87, %88 : vector<1x32xf32>
    %90 = tpu.reciprocal %89 {approx = true} : vector<1x32xf32> -> vector<1x32xf32>
    %91 = arith.mulf %87, %90 : vector<1x32xf32>
    %92 = arith.mulf %81, %91 : vector<1x32xf32>
    %93 = arith.truncf %92 : vector<1x32xf32> to vector<1x32xbf16>
    %c0_28 = arith.constant 0 : index
    %c0_29 = arith.constant 0 : index
    %94 = vector.load %arg6[%c0_28, %c0_29] : memref<32x256xbf16, #tpu.memory_space<vmem>>, vector<32x256xbf16>
    %cst_30 = arith.constant dense<0.000000e+00> : vector<1x256xf32>
    %95 = tpu.matmul %93, %94, %cst_30 {dimension_numbers = #tpu.dot_dimension_numbers<[1], [0], [0], [1], [0, 0, 1, 1], [], []>} : vector<1x32xbf16>, vector<32x256xbf16>, vector<1x256xf32> -> vector<1x256xf32>
    %96 = vector.shape_cast %79 : vector<16x128xf32> to vector<1x16x128xf32>
    %97 = vector.extract_strided_slice %95 {offsets = [0, 0], sizes = [1, 128], strides = [1, 1]} : vector<1x256xf32> to vector<1x128xf32>
    %98 = arith.addf %97, %7 : vector<1x128xf32>
    %99 = vector.extract_strided_slice %95 {offsets = [0, 128], sizes = [1, 128], strides = [1, 1]} : vector<1x256xf32> to vector<1x128xf32>
    %100 = arith.addf %99, %8 : vector<1x128xf32>
    %101 = vector.shape_cast %98 : vector<1x128xf32> to vector<1x1x128xf32>
    %102 = vector.broadcast %101 : vector<1x1x128xf32> to vector<1x16x128xf32>
    %103 = arith.mulf %96, %102 : vector<1x16x128xf32>
    %104 = vector.shape_cast %100 : vector<1x128xf32> to vector<1x1x128xf32>
    %105 = vector.broadcast %104 : vector<1x1x128xf32> to vector<1x16x128xf32>
    %106 = arith.addf %103, %105 : vector<1x16x128xf32>
    %107 = vector.shape_cast %106 : vector<1x16x128xf32> to vector<16x128xf32>
    %c1_i32_31 = arith.constant 1 : i32
    %108 = tpu.dynamic_rotate %107 by %c1_i32_31 dim 0 : vector<16x128xf32>, i32 -> vector<16x128xf32>
    %c1_i32_32 = arith.constant 1 : i32
    %109 = vector.broadcast %c1_i32_32 : i32 to vector<16x1xi32>
    %110 = arith.cmpi sge, %13, %109 : vector<16x1xi32>
    %111 = arith.extui %110 : vector<16x1xi1> to vector<16x1xi32>
    %112 = arith.sitofp %111 : vector<16x1xi32> to vector<16x1xf32>
    %113 = vector.broadcast %112 : vector<16x1xf32> to vector<16x128xf32>
    %114 = arith.mulf %108, %113 : vector<16x128xf32>
    %115 = arith.truncf %114 : vector<16x128xf32> to vector<16x128xbf16>
    %116 = arith.truncf %107 : vector<16x128xf32> to vector<16x128xbf16>
    %c15_i32_33 = arith.constant 15 : i32
    %117 = tpu.dynamic_rotate %107 by %c15_i32_33 dim 0 : vector<16x128xf32>, i32 -> vector<16x128xf32>
    %c15_i32_34 = arith.constant 15 : i32
    %118 = vector.broadcast %c15_i32_34 : i32 to vector<16x1xi32>
    %119 = arith.cmpi slt, %13, %118 : vector<16x1xi32>
    %120 = arith.extui %119 : vector<16x1xi1> to vector<16x1xi32>
    %121 = arith.sitofp %120 : vector<16x1xi32> to vector<16x1xf32>
    %122 = vector.broadcast %121 : vector<16x1xf32> to vector<16x128xf32>
    %123 = arith.mulf %117, %122 : vector<16x128xf32>
    %124 = arith.truncf %123 : vector<16x128xf32> to vector<16x128xbf16>
    %125 = tpu.concatenate %115, %116, %124 in 1 : vector<16x128xbf16>, vector<16x128xbf16>, vector<16x128xbf16> -> vector<16x384xbf16>
    %c0_35 = arith.constant 0 : index
    %c0_36 = arith.constant 0 : index
    %126 = vector.load %arg4[%c0_35, %c0_36] : memref<384x128xbf16, #tpu.memory_space<vmem>>, vector<384x128xbf16>
    %cst_37 = arith.constant dense<0.000000e+00> : vector<16x128xf32>
    %127 = tpu.matmul %125, %126, %cst_37 {dimension_numbers = #tpu.dot_dimension_numbers<[1], [0], [0], [1], [0, 0, 1, 1], [], []>} : vector<16x384xbf16>, vector<384x128xbf16>, vector<16x128xf32> -> vector<16x128xf32>
    %128 = vector.broadcast %4 : vector<1x128xf32> to vector<16x128xf32>
    %129 = arith.addf %127, %128 : vector<16x128xf32>
    %130 = vector.shape_cast %129 : vector<16x128xf32> to vector<1x16x128xf32>
    %cst_38 = arith.constant dense<0.000000e+00> : vector<1x128xf32>
    %131 = vector.multi_reduction <add>, %130, %cst_38 [1] : vector<1x16x128xf32> to vector<1x128xf32>
    %132 = arith.mulf %130, %130 : vector<1x16x128xf32>
    %cst_39 = arith.constant dense<0.000000e+00> : vector<1x128xf32>
    %133 = vector.multi_reduction <add>, %132, %cst_39 [1] : vector<1x16x128xf32> to vector<1x128xf32>
    %134 = tpu.concatenate %131, %133 in 0 : vector<1x128xf32>, vector<1x128xf32> -> vector<2x128xf32>
    %cst_40 = arith.constant dense<0.000000e+00> : vector<2x4xf32>
    %135 = tpu.matmul %134, %10, %cst_40 {dimension_numbers = #tpu.dot_dimension_numbers<[1], [0], [0], [1], [0, 0, 1, 1], [], []>} : vector<2x128xf32>, vector<128x4xf32>, vector<2x4xf32> -> vector<2x4xf32>
    %cst_41 = arith.constant 1.562500e-02 : f32
    %136 = vector.broadcast %cst_41 : f32 to vector<2x4xf32>
    %137 = arith.mulf %135, %136 : vector<2x4xf32>
    %138 = vector.extract_strided_slice %137 {offsets = [0, 0], sizes = [1, 4], strides = [1, 1]} : vector<2x4xf32> to vector<1x4xf32>
    %139 = vector.extract_strided_slice %137 {offsets = [1, 0], sizes = [1, 4], strides = [1, 1]} : vector<2x4xf32> to vector<1x4xf32>
    %140 = arith.mulf %138, %138 : vector<1x4xf32>
    %141 = arith.subf %139, %140 : vector<1x4xf32>
    %cst_42 = arith.constant 0.000000e+00 : f32
    %142 = vector.broadcast %cst_42 : f32 to vector<1x4xf32>
    %143 = arith.maximumf %141, %142 : vector<1x4xf32>
    %144 = tpu.concatenate %138, %143 in 0 : vector<1x4xf32>, vector<1x4xf32> -> vector<2x4xf32>
    %cst_43 = arith.constant dense<0.000000e+00> : vector<2x128xf32>
    %145 = tpu.matmul %144, %11, %cst_43 {dimension_numbers = #tpu.dot_dimension_numbers<[1], [0], [0], [1], [0, 0, 1, 1], [], []>} : vector<2x4xf32>, vector<4x128xf32>, vector<2x128xf32> -> vector<2x128xf32>
    %146 = vector.extract_strided_slice %145 {offsets = [0, 0], sizes = [1, 128], strides = [1, 1]} : vector<2x128xf32> to vector<1x128xf32>
    %147 = vector.extract_strided_slice %145 {offsets = [1, 0], sizes = [1, 128], strides = [1, 1]} : vector<2x128xf32> to vector<1x128xf32>
    %cst_44 = arith.constant 9.99999974E-6 : f32
    %148 = vector.broadcast %cst_44 : f32 to vector<1x128xf32>
    %149 = arith.addf %147, %148 : vector<1x128xf32>
    %150 = math.rsqrt %149 : vector<1x128xf32>
    %151 = arith.mulf %150, %5 : vector<1x128xf32>
    %152 = arith.mulf %146, %151 : vector<1x128xf32>
    %153 = arith.subf %6, %152 : vector<1x128xf32>
    %154 = vector.shape_cast %151 : vector<1x128xf32> to vector<1x1x128xf32>
    %155 = vector.broadcast %154 : vector<1x1x128xf32> to vector<1x16x128xf32>
    %156 = arith.mulf %130, %155 : vector<1x16x128xf32>
    %157 = vector.shape_cast %153 : vector<1x128xf32> to vector<1x1x128xf32>
    %158 = vector.broadcast %157 : vector<1x1x128xf32> to vector<1x16x128xf32>
    %159 = arith.addf %156, %158 : vector<1x16x128xf32>
    %160 = vector.shape_cast %159 : vector<1x16x128xf32> to vector<16x128xf32>
    %cst_45 = arith.constant 2.000000e+01 : f32
    %161 = vector.broadcast %cst_45 : f32 to vector<16x128xf32>
    %162 = arith.minimumf %160, %161 : vector<16x128xf32>
    %163 = math.exp %162 : vector<16x128xf32>
    %cst_46 = arith.constant 2.000000e+00 : f32
    %164 = vector.broadcast %cst_46 : f32 to vector<16x128xf32>
    %165 = arith.addf %163, %164 : vector<16x128xf32>
    %166 = arith.mulf %163, %165 : vector<16x128xf32>
    %cst_47 = arith.constant 2.000000e+00 : f32
    %167 = vector.broadcast %cst_47 : f32 to vector<16x128xf32>
    %168 = arith.addf %166, %167 : vector<16x128xf32>
    %169 = tpu.reciprocal %168 {approx = true} : vector<16x128xf32> -> vector<16x128xf32>
    %170 = arith.mulf %166, %169 : vector<16x128xf32>
    %171 = arith.mulf %160, %170 : vector<16x128xf32>
    %172 = arith.truncf %15 : vector<16x128xf32> to vector<16x128xbf16>
    %c0_48 = arith.constant 0 : index
    %c0_49 = arith.constant 0 : index
    %173 = vector.load %arg5[%c0_48, %c0_49] : memref<128x128xbf16, #tpu.memory_space<vmem>>, vector<128x128xbf16>
    %cst_50 = arith.constant dense<0.000000e+00> : vector<16x128xf32>
    %174 = tpu.matmul %172, %173, %cst_50 {dimension_numbers = #tpu.dot_dimension_numbers<[1], [0], [0], [1], [0, 0, 1, 1], [], []>} : vector<16x128xbf16>, vector<128x128xbf16>, vector<16x128xf32> -> vector<16x128xf32>
    %175 = vector.broadcast %9 : vector<1x128xf32> to vector<16x128xf32>
    %176 = arith.addf %174, %175 : vector<16x128xf32>
    %177 = arith.addf %171, %176 : vector<16x128xf32>
    %178 = vector.shape_cast %177 : vector<16x128xf32> to vector<1x16x128xf32>
    %c0_51 = arith.constant 0 : index
    %c0_52 = arith.constant 0 : index
    %c0_53 = arith.constant 0 : index
    %179 = vector.load %arg10[%c0_51, %c0_52, %c0_53] : memref<1x16x128xf32, #tpu.memory_space<vmem>>, vector<1x16x128xf32>
    tpu.vector_store %arg10[%c0_51, %c0_52, %c0_53], %178 {strides = array<i32>} : memref<1x16x128xf32, #tpu.memory_space<vmem>>, vector<1x16x128xf32>,
    return
  }
  func.func @transform_0(%arg0: i32) -> (i32, i32, i32) {
    %c0_i32 = arith.constant 0 : i32
    %c0_i32_0 = arith.constant 0 : i32
    %c0_i32_1 = arith.constant 0 : i32
    return %arg0, %c0_i32, %c0_i32_0 : i32, i32, i32
  }
  func.func @transform_1(%arg0: i32) -> (i32, i32, i32) {
    %c0_i32 = arith.constant 0 : i32
    %c0_i32_0 = arith.constant 0 : i32
    %c0_i32_1 = arith.constant 0 : i32
    return %arg0, %c0_i32, %c0_i32_0 : i32, i32, i32
  }
  func.func @transform_2(%arg0: i32) -> (i32, i32) {
    %c0_i32 = arith.constant 0 : i32
    %c0_i32_0 = arith.constant 0 : i32
    %c0_i32_1 = arith.constant 0 : i32
    return %c0_i32, %c0_i32_0 : i32, i32
  }
  func.func @transform_3(%arg0: i32) -> (i32, i32) {
    %c0_i32 = arith.constant 0 : i32
    %c0_i32_0 = arith.constant 0 : i32
    %c0_i32_1 = arith.constant 0 : i32
    return %c0_i32, %c0_i32_0 : i32, i32
  }
  func.func @transform_4(%arg0: i32) -> (i32, i32) {
    %c0_i32 = arith.constant 0 : i32
    %c0_i32_0 = arith.constant 0 : i32
    %c0_i32_1 = arith.constant 0 : i32
    return %c0_i32, %c0_i32_0 : i32, i32
  }
  func.func @transform_5(%arg0: i32) -> (i32, i32) {
    %c0_i32 = arith.constant 0 : i32
    %c0_i32_0 = arith.constant 0 : i32
    %c0_i32_1 = arith.constant 0 : i32
    return %c0_i32, %c0_i32_0 : i32, i32
  }
  func.func @transform_6(%arg0: i32) -> (i32, i32) {
    %c0_i32 = arith.constant 0 : i32
    %c0_i32_0 = arith.constant 0 : i32
    %c0_i32_1 = arith.constant 0 : i32
    return %c0_i32, %c0_i32_0 : i32, i32
  }
  func.func @transform_7(%arg0: i32) -> (i32, i32) {
    %c0_i32 = arith.constant 0 : i32
    %c0_i32_0 = arith.constant 0 : i32
    %c0_i32_1 = arith.constant 0 : i32
    return %c0_i32, %c0_i32_0 : i32, i32
  }
  func.func @transform_8(%arg0: i32) -> (i32, i32) {
    %c0_i32 = arith.constant 0 : i32
    %c0_i32_0 = arith.constant 0 : i32
    %c0_i32_1 = arith.constant 0 : i32
    return %c0_i32, %c0_i32_0 : i32, i32
  }
  func.func @transform_9(%arg0: i32) -> (i32, i32, i32) {
    %c0_i32 = arith.constant 0 : i32
    %c0_i32_0 = arith.constant 0 : i32
    %c0_i32_1 = arith.constant 0 : i32
    return %arg0, %c0_i32, %c0_i32_0 : i32, i32, i32
  }
}

</mosaic_0001>

<llo_original>
// kernel: tpu_custom_call.1
$region0: #{tpu_custom_call.1}
  #allocation0 [shape = 'u32[]', space=smem, size = 0x4, offset = 0x4, fixed_abs, tag = 'smem constant byte address 0x4 - core index']
  #allocation1 [shape = 'u32[144,128]{1,0:T(1,128)}', space=vmem, size = 0x12000, scoped, tag = 'internal scratch']
  %s0 = inlined_call_operand.vmem [shape: f32[2,16,128], index: 0, kind: input, shape index: {}]
  %s1 = inlined_call_operand.hbm [shape: f32[2,1,32], index: 1, kind: input, shape index: {}]
  %s2 = inlined_call_operand.hbm [shape: bf16[384,128], index: 2, kind: input, shape index: {}]
  %s3 = inlined_call_operand.hbm [shape: bf16[384,128], index: 3, kind: input, shape index: {}]
  %s4 = inlined_call_operand.vmem [shape: bf16[128,128], index: 4, kind: input, shape index: {}]
  %s5 = inlined_call_operand.vmem [shape: bf16[32,256], index: 5, kind: input, shape index: {}]
  %s6 = inlined_call_operand.vmem [shape: f32[128,4], index: 6, kind: input, shape index: {}]
  %s7 = inlined_call_operand.hbm [shape: f32[4,128], index: 7, kind: input, shape index: {}]
  %s8 = inlined_call_operand.vmem [shape: f32[9,128], index: 8, kind: input, shape index: {}]
  %s9 = inlined_call_operand.hbm [shape: f32[2,16,128], index: 9, kind: output, shape index: {}]
  %s10 = sld [smem:[#allocation0]]
  $region85: #{tpu_custom_call.1} parent=0
    _
  %s12 = ssub.s32 1, %s10
  %s13 = scalar_select 0, %s12, %s10
  $region1: #{tpu_custom_call.1} parent=0
    #allocation2 [shape = 'u8[1024]{0}', space=vmem, size = 0x400, scoped, tag = 'input window, operand 1']
    #allocation3 [shape = 's32[2]{0}', space=sflag, size = 0x8, scoped, tag = 'scoped memory for tpu_custom_call.1']
    #allocation4 [shape = 's32[2]{0}', space=sflag, size = 0x8, scoped, tag = 'scoped memory for tpu_custom_call.1']
    #allocation5 [shape = 'u8[98304]{0}', space=vmem, size = 0x18000, scoped, tag = 'input window, operand 2, single buffered']
    #allocation6 [shape = 's32[1]{0}', space=sflag, size = 0x4, scoped, tag = 'scoped memory for tpu_custom_call.1']
    #allocation7 [shape = 'u8[98304]{0}', space=vmem, size = 0x18000, scoped, tag = 'input window, operand 3, single buffered']
    #allocation8 [shape = 'u8[2048]{0}', space=vmem, size = 0x800, scoped, tag = 'input window, operand 7, single buffered']
    #allocation9 [shape = 's32[1]{0}', space=sflag, size = 0x4, scoped, tag = 'scoped memory for tpu_custom_call.1']
    #allocation10 [shape = 'u8[16384]{0}', space=vmem, size = 0x4000, scoped, tag = 'output window, operand 0']
    %14 = vsyncpa [#allocation3], 0
    %s15 = scalar_lea.sflag [#allocation3], 1
    %16 = vsyncpa %s15, 0
    %17 = vsyncpa [#allocation6], 0
    %18 = vsyncpa [#allocation9], 0
    %19 = vsyncpa [#allocation4], 0
    %s20 = scalar_lea.sflag [#allocation4], 1
    %21 = vsyncpa %s20, 0
    loop: start=0, step=1, limit=4
    $region2: #{tpu_custom_call.1} parent=1 // loop_pre_header
      _
    $region3: #{tpu_custom_call.1} parent=1 // loop_header
      %s23 = sphi 0, %s27
      %p24 = scmp.ge.s32.totalorder %s23, 4
      %s33 = sphi 0, %s35
      %s36 = sphi 0, %s33
      %s37 = sphi 0, %s36
      %s53 = sphi 0, %s37
      %s59 = sphi 0, %s61
      %s62 = sphi 0, %s59
      %s63 = sphi 0, %s62
      %s79 = sphi 0, %s63
      %s83 = sphi 0, %s83
      %s85 = sphi 0, %s83
      %s86 = sphi 0, %s85
      %s100 = sphi 0, %s86
      %s104 = sphi 0, %s104
      %s106 = sphi 0, %s104
      %s107 = sphi 0, %s106
      %s121 = sphi 0, %s107
      %s125 = sphi 0, %s125
      %s127 = sphi 0, %s125
      %s128 = sphi 0, %s127
      %s142 = sphi 0, %s128
      %s146 = sphi 0, %s146
      %s148 = sphi 0, %s146
      %s149 = sphi 0, %s148
      %s163 = sphi 0, %s149
      %s167 = sphi 0, %s167
      %s169 = sphi 0, %s167
      %s170 = sphi 0, %s169
      %s184 = sphi 0, %s170
      %s188 = sphi 0, %s188
      %s190 = sphi 0, %s188
      %s191 = sphi 0, %s190
      %s205 = sphi 0, %s191
      %s209 = sphi 0, %s209
      %s211 = sphi 0, %s209
      %s212 = sphi 0, %s211
      %s226 = sphi 0, %s212
      %s232 = sphi 0, %s234
      %s235 = sphi 0, %s232
      %s236 = sphi 0, %s235
      %s252 = sphi 0, %s236
    $region4: #{tpu_custom_call.1} parent=1 // loop_header_branch
      %26 = sbr.rel (%p24) target = $region8
    $region5: #{tpu_custom_call.1} parent=1 // loop_body
      %s28 = ssub.s32 %s23, 1
      %s29 = ssub.s32 %s23, 2
      %s30 = sadd.s32 %s23, 1
      %s31 = ssub.s32 %s23, %s30
      %p32 = scmp.eq.s32.totalorder %s31, 0
      %s34 = sadd.s32 %s33, 1
      %s35 = scalar_select %p32, %s33, %s34
      %p38 = pneg %p32
      %p39 = scmp.eq.s32.totalorder %s23, 1
      %p40 = por %p38, %p39
      %p41 = scmp.ne.s32.totalorder %s33, %s36
      %p42 = scmp.eq.s32.totalorder %s23, 0
      %p43 = por %p41, %p42
      %p44 = scmp.ne.s32.totalorder %s33, %s36
      %p45 = scmp.eq.s32.totalorder %s28, 1
      %p46 = por %p44, %p45
      %p47 = scmp.ne.s32.totalorder %s36, %s37
      %p48 = scmp.eq.s32.totalorder %s28, 0
      %p49 = por %p47, %p48
      %p50 = scmp.ne.s32.totalorder %s36, %s37
      %p51 = scmp.eq.s32.totalorder %s29, 1
      %p52 = por %p50, %p51
      %p54 = scmp.ne.s32.totalorder %s37, %s53
      %p55 = scmp.eq.s32.totalorder %s29, 0
      %p56 = por %p54, %p55
      %s57 = ssub.s32 %s23, %s30
      %p58 = scmp.eq.s32.totalorder %s57, 0
      %s60 = sadd.s32 %s59, 1
      %s61 = scalar_select %p58, %s59, %s60
      %p64 = pneg %p58
      %p65 = scmp.eq.s32.totalorder %s23, 1
      %p66 = por %p64, %p65
      %p67 = scmp.ne.s32.totalorder %s59, %s62
      %p68 = scmp.eq.s32.totalorder %s23, 0
      %p69 = por %p67, %p68
      %p70 = scmp.ne.s32.totalorder %s59, %s62
      %p71 = scmp.eq.s32.totalorder %s28, 1
      %p72 = por %p70, %p71
      %p73 = scmp.ne.s32.totalorder %s62, %s63
      %p74 = scmp.eq.s32.totalorder %s28, 0
      %p75 = por %p73, %p74
      %p76 = scmp.ne.s32.totalorder %s62, %s63
      %p77 = scmp.eq.s32.totalorder %s29, 1
      %p78 = por %p76, %p77
      %p80 = scmp.ne.s32.totalorder %s63, %s79
      %p81 = scmp.eq.s32.totalorder %s29, 0
      %p82 = por %p80, %p81
      %s84 = sadd.s32 %s83, 1
      %p87 = scmp.eq.s32.totalorder %s23, 1
      %p88 = scmp.ne.s32.totalorder %s83, %s85
      %p89 = scmp.eq.s32.totalorder %s23, 0
      %p90 = por %p88, %p89
      %p91 = scmp.ne.s32.totalorder %s83, %s85
      %p92 = scmp.eq.s32.totalorder %s28, 1
      %p93 = por %p91, %p92
      %p94 = scmp.ne.s32.totalorder %s85, %s86
      %p95 = scmp.eq.s32.totalorder %s28, 0
      %p96 = por %p94, %p95
      %p97 = scmp.ne.s32.totalorder %s85, %s86
      %p98 = scmp.eq.s32.totalorder %s29, 1
      %p99 = por %p97, %p98
      %p101 = scmp.ne.s32.totalorder %s86, %s100
      %p102 = scmp.eq.s32.totalorder %s29, 0
      %p103 = por %p101, %p102
      %s105 = sadd.s32 %s104, 1
      %p108 = scmp.eq.s32.totalorder %s23, 1
      %p109 = scmp.ne.s32.totalorder %s104, %s106
      %p110 = scmp.eq.s32.totalorder %s23, 0
      %p111 = por %p109, %p110
      %p112 = scmp.ne.s32.totalorder %s104, %s106
      %p113 = scmp.eq.s32.totalorder %s28, 1
      %p114 = por %p112, %p113
      %p115 = scmp.ne.s32.totalorder %s106, %s107
      %p116 = scmp.eq.s32.totalorder %s28, 0
      %p117 = por %p115, %p116
      %p118 = scmp.ne.s32.totalorder %s106, %s107
      %p119 = scmp.eq.s32.totalorder %s29, 1
      %p120 = por %p118, %p119
      %p122 = scmp.ne.s32.totalorder %s107, %s121
      %p123 = scmp.eq.s32.totalorder %s29, 0
      %p124 = por %p122, %p123
      %s126 = sadd.s32 %s125, 1
      %p129 = scmp.eq.s32.totalorder %s23, 1
      %p130 = scmp.ne.s32.totalorder %s125, %s127
      %p131 = scmp.eq.s32.totalorder %s23, 0
      %p132 = por %p130, %p131
      %p133 = scmp.ne.s32.totalorder %s125, %s127
      %p134 = scmp.eq.s32.totalorder %s28, 1
      %p135 = por %p133, %p134
      %p136 = scmp.ne.s32.totalorder %s127, %s128
      %p137 = scmp.eq.s32.totalorder %s28, 0
      %p138 = por %p136, %p137
      %p139 = scmp.ne.s32.totalorder %s127, %s128
      %p140 = scmp.eq.s32.totalorder %s29, 1
      %p141 = por %p139, %p140
      %p143 = scmp.ne.s32.totalorder %s128, %s142
      %p144 = scmp.eq.s32.totalorder %s29, 0
      %p145 = por %p143, %p144
      %s147 = sadd.s32 %s146, 1
      %p150 = scmp.eq.s32.totalorder %s23, 1
      %p151 = scmp.ne.s32.totalorder %s146, %s148
      %p152 = scmp.eq.s32.totalorder %s23, 0
      %p153 = por %p151, %p152
      %p154 = scmp.ne.s32.totalorder %s146, %s148
      %p155 = scmp.eq.s32.totalorder %s28, 1
      %p156 = por %p154, %p155
      %p157 = scmp.ne.s32.totalorder %s148, %s149
      %p158 = scmp.eq.s32.totalorder %s28, 0
      %p159 = por %p157, %p158
      %p160 = scmp.ne.s32.totalorder %s148, %s149
      %p161 = scmp.eq.s32.totalorder %s29, 1
      %p162 = por %p160, %p161
      %p164 = scmp.ne.s32.totalorder %s149, %s163
      %p165 = scmp.eq.s32.totalorder %s29, 0
      %p166 = por %p164, %p165
      %s168 = sadd.s32 %s167, 1
      %p171 = scmp.eq.s32.totalorder %s23, 1
      %p172 = scmp.ne.s32.totalorder %s167, %s169
      %p173 = scmp.eq.s32.totalorder %s23, 0
      %p174 = por %p172, %p173
      %p175 = scmp.ne.s32.totalorder %s167, %s169
      %p176 = scmp.eq.s32.totalorder %s28, 1
      %p177 = por %p175, %p176
      %p178 = scmp.ne.s32.totalorder %s169, %s170
      %p179 = scmp.eq.s32.totalorder %s28, 0
      %p180 = por %p178, %p179
      %p181 = scmp.ne.s32.totalorder %s169, %s170
      %p182 = scmp.eq.s32.totalorder %s29, 1
      %p183 = por %p181, %p182
      %p185 = scmp.ne.s32.totalorder %s170, %s184
      %p186 = scmp.eq.s32.totalorder %s29, 0
      %p187 = por %p185, %p186
      %s189 = sadd.s32 %s188, 1
      %p192 = scmp.eq.s32.totalorder %s23, 1
      %p193 = scmp.ne.s32.totalorder %s188, %s190
      %p194 = scmp.eq.s32.totalorder %s23, 0
      %p195 = por %p193, %p194
      %p196 = scmp.ne.s32.totalorder %s188, %s190
      %p197 = scmp.eq.s32.totalorder %s28, 1
      %p198 = por %p196, %p197
      %p199 = scmp.ne.s32.totalorder %s190, %s191
      %p200 = scmp.eq.s32.totalorder %s28, 0
      %p201 = por %p199, %p200
      %p202 = scmp.ne.s32.totalorder %s190, %s191
      %p203 = scmp.eq.s32.totalorder %s29, 1
      %p204 = por %p202, %p203
      %p206 = scmp.ne.s32.totalorder %s191, %s205
      %p207 = scmp.eq.s32.totalorder %s29, 0
      %p208 = por %p206, %p207
      %s210 = sadd.s32 %s209, 1
      %p213 = scmp.eq.s32.totalorder %s23, 1
      %p214 = scmp.ne.s32.totalorder %s209, %s211
      %p215 = scmp.eq.s32.totalorder %s23, 0
      %p216 = por %p214, %p215
      %p217 = scmp.ne.s32.totalorder %s209, %s211
      %p218 = scmp.eq.s32.totalorder %s28, 1
      %p219 = por %p217, %p218
      %p220 = scmp.ne.s32.totalorder %s211, %s212
      %p221 = scmp.eq.s32.totalorder %s28, 0
      %p222 = por %p220, %p221
      %p223 = scmp.ne.s32.totalorder %s211, %s212
      %p224 = scmp.eq.s32.totalorder %s29, 1
      %p225 = por %p223, %p224
      %p227 = scmp.ne.s32.totalorder %s212, %s226
      %p228 = scmp.eq.s32.totalorder %s29, 0
      %p229 = por %p227, %p228
      %s230 = ssub.s32 %s23, %s30
      %p231 = scmp.eq.s32.totalorder %s230, 0
      %s233 = sadd.s32 %s232, 1
      %s234 = scalar_select %p231, %s232, %s233
      %p237 = pneg %p231
      %p238 = scmp.eq.s32.totalorder %s23, 1
      %p239 = por %p237, %p238
      %p240 = scmp.ne.s32.totalorder %s232, %s235
      %p241 = scmp.eq.s32.totalorder %s23, 0
      %p242 = por %p240, %p241
      %p243 = scmp.ne.s32.totalorder %s232, %s235
      %p244 = scmp.eq.s32.totalorder %s28, 1
      %p245 = por %p243, %p244
      %p246 = scmp.ne.s32.totalorder %s235, %s236
      %p247 = scmp.eq.s32.totalorder %s28, 0
      %p248 = por %p246, %p247
      %p249 = scmp.ne.s32.totalorder %s235, %s236
      %p250 = scmp.eq.s32.totalorder %s29, 1
      %p251 = por %p249, %p250
      %p253 = scmp.ne.s32.totalorder %s236, %s252
      %p254 = scmp.eq.s32.totalorder %s29, 0
      %p255 = por %p253, %p254
      %p256 = scmp.le.s32.totalorder 1, %s23
      %p257 = scmp.lt.s32.totalorder %s23, 3
      %p258 = pnand %p256, %p257
      %p259 = pneg %p258
      // Predicated region
      $region9: #{tpu_custom_call.1} parent=5 // pred_check
        _
      $region10: #{tpu_custom_call.1} parent=5 // pred_check_branch
        %261 = sbr.rel (%p258) target = $region12
      $region11: #{tpu_custom_call.1} parent=5 // pred_region
        %s262 = ssub.s32 %s23, 1
        // Predicated region
        $region13: #{tpu_custom_call.1} parent=11 // pred_check
          %p263 = pneg %p96
        $region14: #{tpu_custom_call.1} parent=11 // pred_check_branch
          %265 = sbr.rel (%p263) target = $region16
        $region15: #{tpu_custom_call.1} parent=11 // pred_region
          %s267 = ssub.s32 3072, 3072
          %268 = vsyncadd [#allocation6], %s267
          %s269 = sshll.u32 [#allocation5], 4
          %s270 = int_to_ptr.vmem [resolvable:$true] %s269
          %275 = dma.hbm_to_vmem [thread:$0]  %s2, 3072, %s270, [#allocation6], 64, 64, 4
        $region16: #{tpu_custom_call.1} parent=11 // pred_fallthru
          _
        // Predicated region
        $region17: #{tpu_custom_call.1} parent=11 // pred_check
          %p276 = pneg %p117
        $region18: #{tpu_custom_call.1} parent=11 // pred_check_branch
          %278 = sbr.rel (%p276) target = $region20
        $region19: #{tpu_custom_call.1} parent=11 // pred_region
          %s280 = ssub.s32 3072, 3072
          %281 = vsyncadd [#allocation6], %s280
          %s282 = sshll.u32 [#allocation7], 4
          %s283 = int_to_ptr.vmem [resolvable:$true] %s282
          %288 = dma.hbm_to_vmem [thread:$0]  %s3, 3072, %s283, [#allocation6], 64, 64, 4
        $region20: #{tpu_custom_call.1} parent=11 // pred_fallthru
          _
        // Predicated region
        $region21: #{tpu_custom_call.1} parent=11 // pred_check
          %p289 = pneg %p138
        $region22: #{tpu_custom_call.1} parent=11 // pred_check_branch
          %291 = sbr.rel (%p289) target = $region24
        $region23: #{tpu_custom_call.1} parent=11 // pred_region
          _
        $region24: #{tpu_custom_call.1} parent=11 // pred_fallthru
          _
        // Predicated region
        $region25: #{tpu_custom_call.1} parent=11 // pred_check
          %p292 = pneg %p159
        $region26: #{tpu_custom_call.1} parent=11 // pred_check_branch
          %294 = sbr.rel (%p292) target = $region28
        $region27: #{tpu_custom_call.1} parent=11 // pred_region
          _
        $region28: #{tpu_custom_call.1} parent=11 // pred_fallthru
          _
        // Predicated region
        $region29: #{tpu_custom_call.1} parent=11 // pred_check
          %p295 = pneg %p180
        $region30: #{tpu_custom_call.1} parent=11 // pred_check_branch
          %297 = sbr.rel (%p295) target = $region32
        $region31: #{tpu_custom_call.1} parent=11 // pred_region
          _
        $region32: #{tpu_custom_call.1} parent=11 // pred_fallthru
          _
        // Predicated region
        $region33: #{tpu_custom_call.1} parent=11 // pred_check
          %p298 = pneg %p201
        $region34: #{tpu_custom_call.1} parent=11 // pred_check_branch
          %300 = sbr.rel (%p298) target = $region36
        $region35: #{tpu_custom_call.1} parent=11 // pred_region
          %s302 = ssub.s32 64, 64
          %303 = vsyncadd [#allocation9], %s302
          %s305 = sshll.u32 [#allocation8], 4
          %s306 = int_to_ptr.vmem [resolvable:$true] %s305
          %308 = dma.hbm_to_vmem [thread:$0]  %s7, 64, %s306, [#allocation9]
        $region36: #{tpu_custom_call.1} parent=11 // pred_fallthru
          _
        // Predicated region
        $region37: #{tpu_custom_call.1} parent=11 // pred_check
          %p309 = pneg %p222
        $region38: #{tpu_custom_call.1} parent=11 // pred_check_branch
          %311 = sbr.rel (%p309) target = $region40
        $region39: #{tpu_custom_call.1} parent=11 // pred_region
          _
        $region40: #{tpu_custom_call.1} parent=11 // pred_fallthru
          _
      $region12: #{tpu_custom_call.1} parent=5 // pred_fallthru
        _
      %p312 = scmp.lt.s32.totalorder %s23, 2
      // Predicated region
      $region41: #{tpu_custom_call.1} parent=5 // pred_check
        %p313 = pneg %p312
      $region42: #{tpu_custom_call.1} parent=5 // pred_check_branch
        %315 = sbr.rel (%p313) target = $region44
      $region43: #{tpu_custom_call.1} parent=5 // pred_region
        // Predicated region
        $region45: #{tpu_custom_call.1} parent=43 // pred_check
          %p316 = pneg %p43
        $region46: #{tpu_custom_call.1} parent=43 // pred_check_branch
          %318 = sbr.rel (%p316) target = $region48
        $region47: #{tpu_custom_call.1} parent=43 // pred_region
          %p319 = scmp.lt.s32.totalorder %s23, 1
          %s320 = scalar_select %p319, %s23, 1
          %s321 = smul.addr %s320, 2
          %s322 = smul.addr %s321, 8
          %s323 = scalar_lea.vmem %s0, %s322
        $region48: #{tpu_custom_call.1} parent=43 // pred_fallthru
          _
        // Predicated region
        $region49: #{tpu_custom_call.1} parent=43 // pred_check
          %p324 = pneg %p69
        $region50: #{tpu_custom_call.1} parent=43 // pred_check_branch
          %326 = sbr.rel (%p324) target = $region52
        $region51: #{tpu_custom_call.1} parent=43 // pred_region
          %s327 = sand.u32 %s59, 1
          %s328 = scalar_lea.sflag [#allocation3], %s327
          %s329 = sand.u32 %s59, 1
          %s330 = scalar_lea.vmem [#allocation2], %s329
          %s332 = ssub.s32 16, 16
          %333 = vsyncadd %s328, %s332
          %s334 = smul.addr %s23, 16
          %s335 = scalar_lea.hbm %s1, %s334
          %s337 = sshll.u32 %s330, 4
          %s338 = int_to_ptr.vmem [resolvable:$true] %s337
          %340 = dma.hbm_to_vmem [thread:$0]  %s335, 16, %s338, %s328
        $region52: #{tpu_custom_call.1} parent=43 // pred_fallthru
          _
      $region44: #{tpu_custom_call.1} parent=5 // pred_fallthru
        _
      %p341 = scmp.le.s32.totalorder 1, %s23
      %p342 = scmp.lt.s32.totalorder %s23, 3
      %p343 = pnand %p341, %p342
      %p344 = pneg %p343
      // Predicated region
      $region53: #{tpu_custom_call.1} parent=5 // pred_check
        _
      $region54: #{tpu_custom_call.1} parent=5 // pred_check_branch
        %346 = sbr.rel (%p343) target = $region56
      $region55: #{tpu_custom_call.1} parent=5 // pred_region
        %s347 = ssub.s32 %s23, 1
        %s348 = sand.u32 %s62, 1
        %s349 = scalar_lea.sflag [#allocation3], %s348
        %s350 = sand.u32 %s62, 1
        %s351 = scalar_lea.vmem [#allocation2], %s350
        // Predicated region
        $region57: #{tpu_custom_call.1} parent=55 // pred_check
          %p352 = pneg %p75
        $region58: #{tpu_custom_call.1} parent=55 // pred_check_branch
          %354 = sbr.rel (%p352) target = $region60
        $region59: #{tpu_custom_call.1} parent=55 // pred_region
          %355 = dma.done %s349, 16
        $region60: #{tpu_custom_call.1} parent=55 // pred_fallthru
          _
        // Predicated region
        $region61: #{tpu_custom_call.1} parent=55 // pred_check
          %p356 = pneg %p96
        $region62: #{tpu_custom_call.1} parent=55 // pred_check_branch
          %358 = sbr.rel (%p356) target = $region64
        $region63: #{tpu_custom_call.1} parent=55 // pred_region
          %359 = dma.done [#allocation6], 3072
        $region64: #{tpu_custom_call.1} parent=55 // pred_fallthru
          _
        // Predicated region
        $region65: #{tpu_custom_call.1} parent=55 // pred_check
          %p360 = pneg %p117
        $region66: #{tpu_custom_call.1} parent=55 // pred_check_branch
          %362 = sbr.rel (%p360) target = $region68
        $region67: #{tpu_custom_call.1} parent=55 // pred_region
          %363 = dma.done [#allocation6], 3072
        $region68: #{tpu_custom_call.1} parent=55 // pred_fallthru
          _
        // Predicated region
        $region69: #{tpu_custom_call.1} parent=55 // pred_check
          %p364 = pneg %p201
        $region70: #{tpu_custom_call.1} parent=55 // pred_check_branch
          %366 = sbr.rel (%p364) target = $region72
        $region71: #{tpu_custom_call.1} parent=55 // pred_region
          %367 = dma.done [#allocation9], 64
        $region72: #{tpu_custom_call.1} parent=55 // pred_fallthru
          _
        %p368 = scmp.lt.s32.totalorder %s28, 1
        %s369 = scalar_select %p368, %s28, 1
        %s370 = smul.addr %s369, 2
        %s371 = smul.addr %s370, 8
        %s372 = scalar_lea.vmem %s0, %s371
        %p373 = pneg %p49
        %p374 = pneg %p46
        %s375 = sand.u32 %s62, 1
        %s376 = scalar_lea.sflag [#allocation3], %s375
        %s377 = sand.u32 %s62, 1
        %s378 = scalar_lea.vmem [#allocation2], %s377
        %p379 = pneg %p75
        %p380 = pneg %p72
        %p381 = pneg %p96
        %p382 = pneg %p93
        %p383 = pneg %p117
        %p384 = pneg %p114
        %p385 = pneg %p138
        %p386 = pneg %p135
        %p387 = pneg %p159
        %p388 = pneg %p156
        %p389 = pneg %p180
        %p390 = pneg %p177
        %p391 = pneg %p201
        %p392 = pneg %p198
        %p393 = pneg %p222
        %p394 = pneg %p219
        %p395 = pneg %p248
        %p396 = pneg %p245
        %s397 = sand.u32 %s235, 1
        %s398 = scalar_lea.sflag [#allocation4], %s397
        %s399 = sand.u32 %s235, 1
        %s400 = smul.addr %s399, 16
        %s401 = scalar_lea.vmem [#allocation10], %s400
        %p402 = scmp.lt.s32.totalorder %s28, 1
        %s403 = scalar_select %p402, %s28, 1
        %s404 = smul.addr %s403, 2
        %s405 = smul.addr %s404, 8
        %s406 = scalar_lea.vmem %s0, %s405
        %v408 = vld [vmem:[%s8] sm:$0xff]
        %v409 = vld [vmem:[%s8 + $0x8] sm:$0x1]
        %v410 = vld [vmem:[%s6] sm:$0xff]
        %v411 = vld [vmem:[%s6 + $0x8] sm:$0xff]
        %v412 = vld [vmem:[%s6 + $0x10] sm:$0xff]
        %v413 = vld [vmem:[%s6 + $0x18] sm:$0xff]
        %v414 = vld [vmem:[%s6 + $0x20] sm:$0xff]
        %v415 = vld [vmem:[%s6 + $0x28] sm:$0xff]
        %v416 = vld [vmem:[%s6 + $0x30] sm:$0xff]
        %v417 = vld [vmem:[%s6 + $0x38] sm:$0xff]
        %v418 = vld [vmem:[%s6 + $0x40] sm:$0xff]
        %v419 = vld [vmem:[%s6 + $0x48] sm:$0xff]
        %v420 = vld [vmem:[%s6 + $0x50] sm:$0xff]
        %v421 = vld [vmem:[%s6 + $0x58] sm:$0xff]
        %v422 = vld [vmem:[%s6 + $0x60] sm:$0xff]
        %v423 = vld [vmem:[%s6 + $0x68] sm:$0xff]
        %v424 = vld [vmem:[%s6 + $0x70] sm:$0xff]
        %v425 = vld [vmem:[%s6 + $0x78] sm:$0xff]
        %v426 = vld [vmem:[#allocation8] sm:$0xf]
        %v427 = vlaneseq
        %v428 = vshrl.u32 %v427, 7
        %v429 = vadd.s32 %v428, 8
        %v430 = vld [vmem:[%s406] sm:$0xff]
        %v431 = vld [vmem:[%s406 + $0x8] sm:$0xff]
        %v432 = vrot.slane %v430, 7
        %v433 = vrot.slane %v431, 7
        %vm434 = vcmp.lt.s32.totalorder %v428, 1
        %v435 = vsel %vm434, %v432, %v433
        %v436 = vsel %vm434, %v433, %v432
        %vm437 = vcmp.ge.s32.totalorder %v428, 1
        %vm438 = vcmp.ge.s32.totalorder %v429, 1
        %v439 = vsel %vm437, 1, 0
        %v440 = vsel %vm438, 1, 0
        %v441 = vcvt.s32.f32 %v439
        %v442 = vcvt.s32.f32 %v440
        %v443 = vmul.f32 %v436, %v441
        %v444 = vmul.f32 %v435, %v442
        %v445 = vpack.c.bf16 %v444, %v443
        %v446 = vpack.c.bf16 %v431, %v430
        %v447 = vrot.slane %v430, 1
        %v448 = vrot.slane %v431, 1
        %vm449 = vcmp.lt.s32.totalorder %v428, 7
        %v450 = vsel %vm449, %v447, %v448
        %v451 = vsel %vm449, %v448, %v447
        %vm452 = vcmp.lt.s32.totalorder %v428, 15
        %vm453 = vcmp.lt.s32.totalorder %v429, 15
        %v454 = vsel %vm452, 1, 0
        %v455 = vsel %vm453, 1, 0
        %v456 = vcvt.s32.f32 %v454
        %v457 = vcvt.s32.f32 %v455
        %v458 = vmul.f32 %v450, %v456
        %v459 = vmul.f32 %v451, %v457
        %v460 = vpack.c.bf16 %v459, %v458
        %v461 = vld [vmem:[#allocation5] sm:$0xf]
        %v462 = vld [vmem:[#allocation5 + $0x4] sm:$0xf]
        %v463 = vld [vmem:[#allocation5 + $0x8] sm:$0xf]
        %v464 = vld [vmem:[#allocation5 + $0xc] sm:$0xf]
        %v465 = vld [vmem:[#allocation5 + $0x10] sm:$0xf]
        %v466 = vld [vmem:[#allocation5 + $0x14] sm:$0xf]
        %v467 = vld [vmem:[#allocation5 + $0x18] sm:$0xf]
        %v468 = vld [vmem:[#allocation5 + $0x1c] sm:$0xf]
        %v469 = vld [vmem:[#allocation5 + $0x20] sm:$0xf]
        %v470 = vld [vmem:[#allocation5 + $0x24] sm:$0xf]
        %v471 = vld [vmem:[#allocation5 + $0x28] sm:$0xf]
        %v472 = vld [vmem:[#allocation5 + $0x2c] sm:$0xf]
        %v473 = vld [vmem:[#allocation5 + $0x30] sm:$0xf]
        %v474 = vld [vmem:[#allocation5 + $0x34] sm:$0xf]
        %v475 = vld [vmem:[#allocation5 + $0x38] sm:$0xf]
        %v476 = vld [vmem:[#allocation5 + $0x3c] sm:$0xf]
        %v477 = vld [vmem:[#allocation5 + $0x40] sm:$0xf]
        %v478 = vld [vmem:[#allocation5 + $0x44] sm:$0xf]
        %v479 = vld [vmem:[#allocation5 + $0x48] sm:$0xf]
        %v480 = vld [vmem:[#allocation5 + $0x4c] sm:$0xf]
        %v481 = vld [vmem:[#allocation5 + $0x50] sm:$0xf]
        %v482 = vld [vmem:[#allocation5 + $0x54] sm:$0xf]
        %v483 = vld [vmem:[#allocation5 + $0x58] sm:$0xf]
        %v484 = vld [vmem:[#allocation5 + $0x5c] sm:$0xf]
        %v485 = vld [vmem:[#allocation5 + $0x60] sm:$0xf]
        %v486 = vld [vmem:[#allocation5 + $0x64] sm:$0xf]
        %v487 = vld [vmem:[#allocation5 + $0x68] sm:$0xf]
        %v488 = vld [vmem:[#allocation5 + $0x6c] sm:$0xf]
        %v489 = vld [vmem:[#allocation5 + $0x70] sm:$0xf]
        %v490 = vld [vmem:[#allocation5 + $0x74] sm:$0xf]
        %v491 = vld [vmem:[#allocation5 + $0x78] sm:$0xf]
        %v492 = vld [vmem:[#allocation5 + $0x7c] sm:$0xf]
        %v493 = vld [vmem:[#allocation5 + $0x80] sm:$0xf]
        %v494 = vld [vmem:[#allocation5 + $0x84] sm:$0xf]
        %v495 = vld [vmem:[#allocation5 + $0x88] sm:$0xf]
        %v496 = vld [vmem:[#allocation5 + $0x8c] sm:$0xf]
        %v497 = vld [vmem:[#allocation5 + $0x90] sm:$0xf]
        %v498 = vld [vmem:[#allocation5 + $0x94] sm:$0xf]
        %v499 = vld [vmem:[#allocation5 + $0x98] sm:$0xf]
        %v500 = vld [vmem:[#allocation5 + $0x9c] sm:$0xf]
        %v501 = vld [vmem:[#allocation5 + $0xa0] sm:$0xf]
        %v502 = vld [vmem:[#allocation5 + $0xa4] sm:$0xf]
        %v503 = vld [vmem:[#allocation5 + $0xa8] sm:$0xf]
        %v504 = vld [vmem:[#allocation5 + $0xac] sm:$0xf]
        %v505 = vld [vmem:[#allocation5 + $0xb0] sm:$0xf]
        %v506 = vld [vmem:[#allocation5 + $0xb4] sm:$0xf]
        %v507 = vld [vmem:[#allocation5 + $0xb8] sm:$0xf]
        %v508 = vld [vmem:[#allocation5 + $0xbc] sm:$0xf]
        %v509 = vlaneseq
        %v510 = vshrl.u32 %v509, 7
        %v511 = vsub.s32 0, %v510
        %v512 = vrot.slane %v408, %v511
        %v561 = vunpack.c.l.b16 %v461
        %v562 = vunpack.c.l.b16 %v462
        %v563 = vunpack.c.l.b16 %v463
        %v564 = vunpack.c.l.b16 %v464
        %v565 = vunpack.c.l.b16 %v465
        %v566 = vunpack.c.l.b16 %v466
        %v567 = vunpack.c.l.b16 %v467
        %v568 = vunpack.c.l.b16 %v468
        %v569 = vunpack.c.l.b16 %v469
        %v570 = vunpack.c.l.b16 %v470
        %v571 = vunpack.c.l.b16 %v471
        %v572 = vunpack.c.l.b16 %v472
        %v573 = vunpack.c.l.b16 %v473
        %v574 = vunpack.c.l.b16 %v474
        %v575 = vunpack.c.l.b16 %v475
        %v576 = vunpack.c.l.b16 %v476
        %v577 = vunpack.c.l.b16 %v477
        %v578 = vunpack.c.l.b16 %v478
        %v579 = vunpack.c.l.b16 %v479
        %v580 = vunpack.c.l.b16 %v480
        %v581 = vunpack.c.l.b16 %v481
        %v582 = vunpack.c.l.b16 %v482
        %v583 = vunpack.c.l.b16 %v483
        %v584 = vunpack.c.l.b16 %v484
        %v585 = vunpack.c.l.b16 %v485
        %v586 = vunpack.c.l.b16 %v486
        %v587 = vunpack.c.l.b16 %v487
        %v588 = vunpack.c.l.b16 %v488
        %v589 = vunpack.c.l.b16 %v489
        %v590 = vunpack.c.l.b16 %v490
        %v591 = vunpack.c.l.b16 %v491
        %v592 = vunpack.c.l.b16 %v492
        %v593 = vunpack.c.l.b16 %v493
        %v594 = vunpack.c.l.b16 %v494
        %v595 = vunpack.c.l.b16 %v495
        %v596 = vunpack.c.l.b16 %v496
        %v597 = vunpack.c.l.b16 %v497
        %v598 = vunpack.c.l.b16 %v498
        %v599 = vunpack.c.l.b16 %v499
        %v600 = vunpack.c.l.b16 %v500
        %v601 = vunpack.c.l.b16 %v501
        %v602 = vunpack.c.l.b16 %v502
        %v603 = vunpack.c.l.b16 %v503
        %v604 = vunpack.c.l.b16 %v504
        %v605 = vunpack.c.l.b16 %v505
        %v606 = vunpack.c.l.b16 %v506
        %v607 = vunpack.c.l.b16 %v507
        %v608 = vunpack.c.l.b16 %v508
        %v609 = vpack.c.b16 %v562, %v561
        %v610 = vpack.c.b16 %v564, %v563
        %v611 = vpack.c.b16 %v566, %v565
        %v612 = vpack.c.b16 %v568, %v567
        %v613 = vpack.c.b16 %v570, %v569
        %v614 = vpack.c.b16 %v572, %v571
        %v615 = vpack.c.b16 %v574, %v573
        %v616 = vpack.c.b16 %v576, %v575
        %v617 = vpack.c.b16 %v578, %v577
        %v618 = vpack.c.b16 %v580, %v579
        %v619 = vpack.c.b16 %v582, %v581
        %v620 = vpack.c.b16 %v584, %v583
        %v621 = vpack.c.b16 %v586, %v585
        %v622 = vpack.c.b16 %v588, %v587
        %v623 = vpack.c.b16 %v590, %v589
        %v624 = vpack.c.b16 %v592, %v591
        %v625 = vpack.c.b16 %v594, %v593
        %v626 = vpack.c.b16 %v596, %v595
        %v627 = vpack.c.b16 %v598, %v597
        %v628 = vpack.c.b16 %v600, %v599
        %v629 = vpack.c.b16 %v602, %v601
        %v630 = vpack.c.b16 %v604, %v603
        %v631 = vpack.c.b16 %v606, %v605
        %v632 = vpack.c.b16 %v608, %v607
        %657 = vmatprep.subr.bf16.mxu0 0
        %658 = vmatpush1.bf16.msra.mxu0 %v616
        %659 = vmatprep.subr.bf16.mxu0 0
        %660 = vmatpush1.bf16.msra.mxu0 %v615
        %661 = vmatprep.subr.bf16.mxu0 0
        %662 = vmatpush1.bf16.msra.mxu0 %v614
        %663 = vmatprep.subr.bf16.mxu0 0
        %664 = vmatpush1.bf16.msra.mxu0 %v613
        %665 = vmatprep.subr.bf16.mxu0 0
        %666 = vmatpush1.bf16.msra.mxu0 %v612
        %667 = vmatprep.subr.bf16.mxu0 0
        %668 = vmatpush1.bf16.msra.mxu0 %v611
        %669 = vmatprep.subr.bf16.mxu0 0
        %670 = vmatpush1.bf16.msra.mxu0 %v610
        %671 = vmatprep.subr.bf16.mxu0 0
        %672 = vmatpush1.bf16.msra.mxu0 %v609
        %673 = vmatprep.subr.bf16.mxu0 0
        %674 = vmatpush2.bf16.msra.mxu0 %v624
        %675 = vmatprep.subr.bf16.mxu0 0
        %676 = vmatpush2.bf16.msra.mxu0 %v623
        %677 = vmatprep.subr.bf16.mxu0 0
        %678 = vmatpush2.bf16.msra.mxu0 %v622
        %679 = vmatprep.subr.bf16.mxu0 0
        %680 = vmatpush2.bf16.msra.mxu0 %v621
        %681 = vmatprep.subr.bf16.mxu0 0
        %682 = vmatpush2.bf16.msra.mxu0 %v620
        %683 = vmatprep.subr.bf16.mxu0 0
        %684 = vmatpush2.bf16.msra.mxu0 %v619
        %685 = vmatprep.subr.bf16.mxu0 0
        %686 = vmatpush2.bf16.msra.mxu0 %v618
        %687 = vmatprep.subr.bf16.mxu0 0
        %688 = vmatpush2.bf16.msra.mxu0 %v617
        %689 = vmatprep.mubr.bf16.mxu0 %v446
        %690 = vmatmul.mubr.bf16.gmra.mxu0 %v445
        %v691 = vpop.f32.mrf.mxu0
        %v692 = vadd.f32 %v512, %v691
        %v693 = vpop.f32.mrf.mxu0
        %v694 = vpop.f32.mrf.mxu0
        %v695 = vadd.f32 %v512, %v694
        %v696 = vpop.f32.mrf.mxu0
        %697 = vdwg.mxu0
        %698 = vmatprep.subr.bf16.mxu0 0
        %699 = vmatpush1.bf16.msra.mxu0 %v632
        %700 = vmatprep.subr.bf16.mxu0 0
        %701 = vmatpush1.bf16.msra.mxu0 %v631
        %702 = vmatprep.subr.bf16.mxu0 0
        %703 = vmatpush1.bf16.msra.mxu0 %v630
        %704 = vmatprep.subr.bf16.mxu0 0
        %705 = vmatpush1.bf16.msra.mxu0 %v629
        %706 = vmatprep.subr.bf16.mxu0 0
        %707 = vmatpush1.bf16.msra.mxu0 %v628
        %708 = vmatprep.subr.bf16.mxu0 0
        %709 = vmatpush1.bf16.msra.mxu0 %v627
        %710 = vmatprep.subr.bf16.mxu0 0
        %711 = vmatpush1.bf16.msra.mxu0 %v626
        %712 = vmatprep.subr.bf16.mxu0 0
        %713 = vmatpush1.bf16.msra.mxu0 %v625
        %714 = vmatprep.subr.bf16.mxu0 0
        %715 = vmatpush2.bf16.msra.mxu0 0
        %716 = vmatprep.subr.bf16.mxu0 0
        %717 = vmatpush2.bf16.msra.mxu0 0
        %718 = vmatprep.subr.bf16.mxu0 0
        %719 = vmatpush2.bf16.msra.mxu0 0
        %720 = vmatprep.subr.bf16.mxu0 0
        %721 = vmatpush2.bf16.msra.mxu0 0
        %722 = vmatprep.subr.bf16.mxu0 0
        %723 = vmatpush2.bf16.msra.mxu0 0
        %724 = vmatprep.subr.bf16.mxu0 0
        %725 = vmatpush2.bf16.msra.mxu0 0
        %726 = vmatprep.subr.bf16.mxu0 0
        %727 = vmatpush2.bf16.msra.mxu0 0
        %728 = vmatprep.subr.bf16.mxu0 0
        %729 = vmatpush2.bf16.msra.mxu0 0
        %730 = vmatprep.mubr.bf16.mxu0 0
        %731 = vmatmul.mubr.bf16.gmra.mxu0 %v460
        %v732 = vpop.f32.mrf.mxu0
        %v733 = vadd.f32 %v692, %v732
        %v734 = vpop.f32.mrf.mxu0
        %v735 = vpop.f32.mrf.mxu0
        %v736 = vadd.f32 %v695, %v735
        %v737 = vpop.f32.mrf.mxu0
        %738 = vdwg.mxu0
        %v739 = vadd.f32 %v733, %v736
        %v740 = vrot.slane %v739, 4
        %v741 = vadd.f32 %v739, %v740
        %v742 = vrot.slane %v741, 2
        %v743 = vadd.f32 %v741, %v742
        %v744 = vrot.slane %v743, 1
        %v745 = vadd.f32 %v743, %v744
        %v746 = vmul.f32 %v733, %v733
        %v747 = vmul.f32 %v736, %v736
        %v748 = vadd.f32 %v746, %v747
        %v749 = vrot.slane %v748, 4
        %v750 = vadd.f32 %v748, %v749
        %v751 = vrot.slane %v750, 2
        %v752 = vadd.f32 %v750, %v751
        %v753 = vrot.slane %v752, 1
        %v754 = vadd.f32 %v752, %v753
        %vm755 = vcmask 1040384
        %v756 = vsel %vm755, %v745, %v754
        %757 = vmatprep.subr.mxu0 0.0
        %758 = vmatpush1.msra.mxu0 %v425
        %759 = vmatprep.subr.mxu0 0.0
        %760 = vmatpush1.msra.mxu0 %v424
        %761 = vmatprep.subr.mxu0 0.0
        %762 = vmatpush1.msra.mxu0 %v423
        %763 = vmatprep.subr.mxu0 0.0
        %764 = vmatpush1.msra.mxu0 %v422
        %765 = vmatprep.subr.mxu0 0.0
        %766 = vmatpush1.msra.mxu0 %v421
        %767 = vmatprep.subr.mxu0 0.0
        %768 = vmatpush1.msra.mxu0 %v420
        %769 = vmatprep.subr.mxu0 0.0
        %770 = vmatpush1.msra.mxu0 %v419
        %771 = vmatprep.subr.mxu0 0.0
        %772 = vmatpush1.msra.mxu0 %v418
        %773 = vmatprep.subr.mxu0 0.0
        %774 = vmatpush1.msra.mxu0 %v417
        %775 = vmatprep.subr.mxu0 0.0
        %776 = vmatpush1.msra.mxu0 %v416
        %777 = vmatprep.subr.mxu0 0.0
        %778 = vmatpush1.msra.mxu0 %v415
        %779 = vmatprep.subr.mxu0 0.0
        %780 = vmatpush1.msra.mxu0 %v414
        %781 = vmatprep.subr.mxu0 0.0
        %782 = vmatpush1.msra.mxu0 %v413
        %783 = vmatprep.subr.mxu0 0.0
        %784 = vmatpush1.msra.mxu0 %v412
        %785 = vmatprep.subr.mxu0 0.0
        %786 = vmatpush1.msra.mxu0 %v411
        %787 = vmatprep.subr.mxu0 0.0
        %788 = vmatpush1.msra.mxu0 %v410
        %789 = vmatprep.subr.mxu0 0.0
        %790 = vmatpush2.msra.mxu0 0.0
        %791 = vmatprep.subr.mxu0 0.0
        %792 = vmatpush2.msra.mxu0 0.0
        %793 = vmatprep.subr.mxu0 0.0
        %794 = vmatpush2.msra.mxu0 0.0
        %795 = vmatprep.subr.mxu0 0.0
        %796 = vmatpush2.msra.mxu0 0.0
        %797 = vmatprep.subr.mxu0 0.0
        %798 = vmatpush2.msra.mxu0 0.0
        %799 = vmatprep.subr.mxu0 0.0
        %800 = vmatpush2.msra.mxu0 0.0
        %801 = vmatprep.subr.mxu0 0.0
        %802 = vmatpush2.msra.mxu0 0.0
        %803 = vmatprep.subr.mxu0 0.0
        %804 = vmatpush2.msra.mxu0 0.0
        %805 = vmatprep.subr.mxu0 0.0
        %806 = vmatpush2.msra.mxu0 0.0
        %807 = vmatprep.subr.mxu0 0.0
        %808 = vmatpush2.msra.mxu0 0.0
        %809 = vmatprep.subr.mxu0 0.0
        %810 = vmatpush2.msra.mxu0 0.0
        %811 = vmatprep.subr.mxu0 0.0
        %812 = vmatpush2.msra.mxu0 0.0
        %813 = vmatprep.subr.mxu0 0.0
        %814 = vmatpush2.msra.mxu0 0.0
        %815 = vmatprep.subr.mxu0 0.0
        %816 = vmatpush2.msra.mxu0 0.0
        %817 = vmatprep.subr.mxu0 0.0
        %818 = vmatpush2.msra.mxu0 0.0
        %819 = vmatprep.subr.mxu0 0.0
        %820 = vmatpush2.msra.mxu0 0.0
        %821 = vmatprep.mubr.f32.mxu0 0.0
        %822 = vmatmul.mubr.f32.gmra.mxu0 %v756
        %v823 = vpop.f32.mrf.mxu0
        %v824 = vadd.f32 0.0, %v823
        %v825 = vpop.f32.mrf.mxu0
        %826 = vdwg.mxu0
        %v827 = vmul.f32 %v824, 0.015625
        %v828 = vmul.f32 %v827, %v827
        %v830 = vrot.slane %v828, 7
        %v832 = vsub.f32 %v827, %v830
        %v833 = vmax.f32 %v832, 0.0
        %v834 = vsel %vm755, %v827, %v833
        %vm835 = vcmask 31744
        %v837 = vsel %vm835, %v834, 0
        %vm839 = vcmask 1043456
        %v841 = vsel %vm839, %v426, 0
        %843 = vmatprep.subr.mxu0 0.0
        %844 = vmatpush1.msra.mxu0 0.0
        %845 = vmatprep.subr.mxu0 0.0
        %846 = vmatpush1.msra.mxu0 0.0
        %847 = vmatprep.subr.mxu0 0.0
        %848 = vmatpush1.msra.mxu0 0.0
        %849 = vmatprep.subr.mxu0 0.0
        %850 = vmatpush1.msra.mxu0 0.0
        %851 = vmatprep.subr.mxu0 0.0
        %852 = vmatpush1.msra.mxu0 0.0
        %853 = vmatprep.subr.mxu0 0.0
        %854 = vmatpush1.msra.mxu0 0.0
        %855 = vmatprep.subr.mxu0 0.0
        %856 = vmatpush1.msra.mxu0 0.0
        %857 = vmatprep.subr.mxu0 0.0
        %858 = vmatpush1.msra.mxu0 0.0
        %859 = vmatprep.subr.mxu0 0.0
        %860 = vmatpush1.msra.mxu0 0.0
        %861 = vmatprep.subr.mxu0 0.0
        %862 = vmatpush1.msra.mxu0 0.0
        %863 = vmatprep.subr.mxu0 0.0
        %864 = vmatpush1.msra.mxu0 0.0
        %865 = vmatprep.subr.mxu0 0.0
        %866 = vmatpush1.msra.mxu0 0.0
        %867 = vmatprep.subr.mxu0 0.0
        %868 = vmatpush1.msra.mxu0 0.0
        %869 = vmatprep.subr.mxu0 0.0
        %870 = vmatpush1.msra.mxu0 0.0
        %871 = vmatprep.subr.mxu0 0.0
        %872 = vmatpush1.msra.mxu0 0.0
        %873 = vmatprep.subr.mxu0 0.0
        %874 = vmatpush1.msra.mxu0 %v841
        %875 = vmatprep.subr.mxu0 0.0
        %876 = vmatpush2.msra.mxu0 0.0
        %877 = vmatprep.subr.mxu0 0.0
        %878 = vmatpush2.msra.mxu0 0.0
        %879 = vmatprep.subr.mxu0 0.0
        %880 = vmatpush2.msra.mxu0 0.0
        %881 = vmatprep.subr.mxu0 0.0
        %882 = vmatpush2.msra.mxu0 0.0
        %883 = vmatprep.subr.mxu0 0.0
        %884 = vmatpush2.msra.mxu0 0.0
        %885 = vmatprep.subr.mxu0 0.0
        %886 = vmatpush2.msra.mxu0 0.0
        %887 = vmatprep.subr.mxu0 0.0
        %888 = vmatpush2.msra.mxu0 0.0
        %889 = vmatprep.subr.mxu0 0.0
        %890 = vmatpush2.msra.mxu0 0.0
        %891 = vmatprep.subr.mxu0 0.0
        %892 = vmatpush2.msra.mxu0 0.0
        %893 = vmatprep.subr.mxu0 0.0
        %894 = vmatpush2.msra.mxu0 0.0
        %895 = vmatprep.subr.mxu0 0.0
        %896 = vmatpush2.msra.mxu0 0.0
        %897 = vmatprep.subr.mxu0 0.0
        %898 = vmatpush2.msra.mxu0 0.0
        %899 = vmatprep.subr.mxu0 0.0
        %900 = vmatpush2.msra.mxu0 0.0
        %901 = vmatprep.subr.mxu0 0.0
        %902 = vmatpush2.msra.mxu0 0.0
        %903 = vmatprep.subr.mxu0 0.0
        %904 = vmatpush2.msra.mxu0 0.0
        %905 = vmatprep.subr.mxu0 0.0
        %906 = vmatpush2.msra.mxu0 0.0
        %907 = vmatprep.mubr.f32.mxu0 0.0
        %908 = vmatmul.mubr.f32.gmra.mxu0 %v837
        %v909 = vpop.f32.mrf.mxu0
        %v910 = vadd.f32 0.0, %v909
        %v911 = vpop.f32.mrf.mxu0
        %912 = vdwg.mxu0
        %v913 = vadd.f32 %v910, 1e-05
        %v914 = vrsqrt.pop %v913
        %v915 = vmul.f32 %v914, %v408
        %v917 = vrot.slane %v915, 1
        %v919 = vmul.f32 %v910, %v917
        %v921 = vrot.slane %v919, 6
        %v923 = vsub.f32 %v408, %v921
        %v924 = vlaneseq
        %v925 = vshrl.u32 %v924, 7
        %v926 = vsub.s32 1, %v925
        %v927 = vrot.slane %v915, %v926
        %v928 = vmul.f32 %v733, %v927
        %v929 = vmul.f32 %v736, %v927
        %v930 = vlaneseq
        %v931 = vshrl.u32 %v930, 7
        %v932 = vsub.s32 2, %v931
        %v933 = vrot.slane %v923, %v932
        %v934 = vadd.f32 %v928, %v933
        %v935 = vadd.f32 %v929, %v933
        %v936 = vmin.f32 %v934, 20.0
        %v937 = vmin.f32 %v935, 20.0
        %v938 = vmul.f32 %v936, 1.442695
        %v939 = vpow.pop %v938
        %v940 = vmul.f32 %v937, 1.442695
        %v941 = vpow.pop %v940
        %v942 = vadd.f32 %v939, 2.0
        %v943 = vadd.f32 %v941, 2.0
        %v944 = vmul.f32 %v939, %v942
        %v945 = vmul.f32 %v941, %v943
        %v946 = vadd.f32 %v944, 2.0
        %v947 = vadd.f32 %v945, 2.0
        %v948 = vrcp.pop %v946
        %v949 = vrcp.pop %v947
        %v950 = vmul.f32 %v944, %v948
        %v951 = vmul.f32 %v945, %v949
        %v952 = vmul.f32 %v934, %v950
        %v953 = vmul.f32 %v935, %v951
        %v954 = vld [vmem:[%s351] sm:$0x1]
        %v955 = vmin.f32 %v954, 20.0
        %v956 = vmul.f32 %v955, 1.442695
        %v957 = vpow.pop %v956
        %v958 = vadd.f32 %v957, 2.0
        %v959 = vmul.f32 %v957, %v958
        %v960 = vadd.f32 %v959, 2.0
        %v961 = vrcp.pop %v960
        %v962 = vmul.f32 %v959, %v961
        %v963 = vmul.f32 %v954, %v962
        %v964 = vpack.c.bf16 %v963, %v963
        %v965 = vld [vmem:[%s5] sm:$0xff]
        %v966 = vld [vmem:[%s5 + $0x8] sm:$0xff]
        %v967 = vld [vmem:[%s5 + $0x10] sm:$0xff]
        %v968 = vld [vmem:[%s5 + $0x18] sm:$0xff]
        %v973 = vunpack.c.l.b16 %v965
        %v974 = vunpack.c.h.b16 %v965
        %v975 = vunpack.c.l.b16 %v966
        %v976 = vunpack.c.h.b16 %v966
        %v977 = vunpack.c.l.b16 %v967
        %v978 = vunpack.c.h.b16 %v967
        %v979 = vunpack.c.l.b16 %v968
        %v980 = vunpack.c.h.b16 %v968
        %v981 = vpack.c.b16 %v975, %v973
        %v982 = vpack.c.b16 %v976, %v974
        %v983 = vpack.c.b16 %v979, %v977
        %v984 = vpack.c.b16 %v980, %v978
        %vm989 = vcmask 261120
        %v991 = vsel %vm989, %v964, 0
        %993 = vmatprep.subr.bf16.mxu0 0
        %994 = vmatpush1.bf16.msra.mxu0 0
        %995 = vmatprep.subr.bf16.mxu0 0
        %996 = vmatpush1.bf16.msra.mxu0 0
        %997 = vmatprep.subr.bf16.mxu0 0
        %998 = vmatpush1.bf16.msra.mxu0 0
        %999 = vmatprep.subr.bf16.mxu0 0
        %1000 = vmatpush1.bf16.msra.mxu0 0
        %1001 = vmatprep.subr.bf16.mxu0 0
        %1002 = vmatpush1.bf16.msra.mxu0 0
        %1003 = vmatprep.subr.bf16.mxu0 0
        %1004 = vmatpush1.bf16.msra.mxu0 0
        %1005 = vmatprep.subr.bf16.mxu0 %v984
        %1006 = vmatpush1.bf16.msra.mxu0 %v983
        %1007 = vmatprep.subr.bf16.mxu0 %v982
        %1008 = vmatpush1.bf16.msra.mxu0 %v981
        %1009 = vmatprep.subr.bf16.mxu0 0
        %1010 = vmatpush2.bf16.msra.mxu0 0
        %1011 = vmatprep.subr.bf16.mxu0 0
        %1012 = vmatpush2.bf16.msra.mxu0 0
        %1013 = vmatprep.subr.bf16.mxu0 0
        %1014 = vmatpush2.bf16.msra.mxu0 0
        %1015 = vmatprep.subr.bf16.mxu0 0
        %1016 = vmatpush2.bf16.msra.mxu0 0
        %1017 = vmatprep.subr.bf16.mxu0 0
        %1018 = vmatpush2.bf16.msra.mxu0 0
        %1019 = vmatprep.subr.bf16.mxu0 0
        %1020 = vmatpush2.bf16.msra.mxu0 0
        %1021 = vmatprep.subr.bf16.mxu0 0
        %1022 = vmatpush2.bf16.msra.mxu0 0
        %1023 = vmatprep.subr.bf16.mxu0 0
        %1024 = vmatpush2.bf16.msra.mxu0 0
        %1025 = vmatprep.mubr.bf16.mxu0 0
        %1026 = vmatmul.mubr.bf16.gmra.mxu0 %v991
        %v1027 = vpop.f32.mrf.mxu0
        %v1028 = vadd.f32 0.0, %v1027
        %v1029 = vpop.f32.mrf.mxu0
        %v1030 = vadd.f32 0.0, %v1029
        %v1031 = vpop.f32.mrf.mxu0
        %v1032 = vpop.f32.mrf.mxu0
        %1033 = vdwg.mxu0
        %v1035 = vrot.slane %v408, 6
        %v1037 = vadd.f32 %v1028, %v1035
        %v1038 = vrot.slane %v408, 7
        %v1040 = vadd.f32 %v1030, %v1038
        %v1041 = vlaneseq
        %v1042 = vshrl.u32 %v1041, 7
        %v1043 = vsub.s32 0, %v1042
        %v1044 = vrot.slane %v1037, %v1043
        %v1045 = vmul.f32 %v952, %v1044
        %v1046 = vmul.f32 %v953, %v1044
        %v1047 = vlaneseq
        %v1048 = vshrl.u32 %v1047, 7
        %v1049 = vsub.s32 0, %v1048
        %v1050 = vrot.slane %v1040, %v1049
        %v1051 = vadd.f32 %v1045, %v1050
        %v1052 = vadd.f32 %v1046, %v1050
        %v1053 = vrot.slane %v1051, 7
        %v1054 = vrot.slane %v1052, 7
        %v1055 = vsel %vm434, %v1053, %v1054
        %v1056 = vsel %vm434, %v1054, %v1053
        %v1057 = vmul.f32 %v1056, %v441
        %v1058 = vmul.f32 %v1055, %v442
        %v1059 = vpack.c.bf16 %v1058, %v1057
        %v1060 = vpack.c.bf16 %v1052, %v1051
        %v1061 = vrot.slane %v1051, 1
        %v1062 = vrot.slane %v1052, 1
        %v1063 = vsel %vm449, %v1061, %v1062
        %v1064 = vsel %vm449, %v1062, %v1061
        %v1065 = vmul.f32 %v1063, %v456
        %v1066 = vmul.f32 %v1064, %v457
        %v1067 = vpack.c.bf16 %v1066, %v1065
        %v1068 = vld [vmem:[#allocation7] sm:$0xf]
        %v1069 = vld [vmem:[#allocation7 + $0x4] sm:$0xf]
        %v1070 = vld [vmem:[#allocation7 + $0x8] sm:$0xf]
        %v1071 = vld [vmem:[#allocation7 + $0xc] sm:$0xf]
        %v1072 = vld [vmem:[#allocation7 + $0x10] sm:$0xf]
        %v1073 = vld [vmem:[#allocation7 + $0x14] sm:$0xf]
        %v1074 = vld [vmem:[#allocation7 + $0x18] sm:$0xf]
        %v1075 = vld [vmem:[#allocation7 + $0x1c] sm:$0xf]
        %v1076 = vld [vmem:[#allocation7 + $0x20] sm:$0xf]
        %v1077 = vld [vmem:[#allocation7 + $0x24] sm:$0xf]
        %v1078 = vld [vmem:[#allocation7 + $0x28] sm:$0xf]
        %v1079 = vld [vmem:[#allocation7 + $0x2c] sm:$0xf]
        %v1080 = vld [vmem:[#allocation7 + $0x30] sm:$0xf]
        %v1081 = vld [vmem:[#allocation7 + $0x34] sm:$0xf]
        %v1082 = vld [vmem:[#allocation7 + $0x38] sm:$0xf]
        %v1083 = vld [vmem:[#allocation7 + $0x3c] sm:$0xf]
        %v1084 = vld [vmem:[#allocation7 + $0x40] sm:$0xf]
        %v1085 = vld [vmem:[#allocation7 + $0x44] sm:$0xf]
        %v1086 = vld [vmem:[#allocation7 + $0x48] sm:$0xf]
        %v1087 = vld [vmem:[#allocation7 + $0x4c] sm:$0xf]
        %v1088 = vld [vmem:[#allocation7 + $0x50] sm:$0xf]
        %v1089 = vld [vmem:[#allocation7 + $0x54] sm:$0xf]
        %v1090 = vld [vmem:[#allocation7 + $0x58] sm:$0xf]
        %v1091 = vld [vmem:[#allocation7 + $0x5c] sm:$0xf]
        %v1092 = vld [vmem:[#allocation7 + $0x60] sm:$0xf]
        %v1093 = vld [vmem:[#allocation7 + $0x64] sm:$0xf]
        %v1094 = vld [vmem:[#allocation7 + $0x68] sm:$0xf]
        %v1095 = vld [vmem:[#allocation7 + $0x6c] sm:$0xf]
        %v1096 = vld [vmem:[#allocation7 + $0x70] sm:$0xf]
        %v1097 = vld [vmem:[#allocation7 + $0x74] sm:$0xf]
        %v1098 = vld [vmem:[#allocation7 + $0x78] sm:$0xf]
        %v1099 = vld [vmem:[#allocation7 + $0x7c] sm:$0xf]
        %v1100 = vld [vmem:[#allocation7 + $0x80] sm:$0xf]
        %v1101 = vld [vmem:[#allocation7 + $0x84] sm:$0xf]
        %v1102 = vld [vmem:[#allocation7 + $0x88] sm:$0xf]
        %v1103 = vld [vmem:[#allocation7 + $0x8c] sm:$0xf]
        %v1104 = vld [vmem:[#allocation7 + $0x90] sm:$0xf]
        %v1105 = vld [vmem:[#allocation7 + $0x94] sm:$0xf]
        %v1106 = vld [vmem:[#allocation7 + $0x98] sm:$0xf]
        %v1107 = vld [vmem:[#allocation7 + $0x9c] sm:$0xf]
        %v1108 = vld [vmem:[#allocation7 + $0xa0] sm:$0xf]
        %v1109 = vld [vmem:[#allocation7 + $0xa4] sm:$0xf]
        %v1110 = vld [vmem:[#allocation7 + $0xa8] sm:$0xf]
        %v1111 = vld [vmem:[#allocation7 + $0xac] sm:$0xf]
        %v1112 = vld [vmem:[#allocation7 + $0xb0] sm:$0xf]
        %v1113 = vld [vmem:[#allocation7 + $0xb4] sm:$0xf]
        %v1114 = vld [vmem:[#allocation7 + $0xb8] sm:$0xf]
        %v1115 = vld [vmem:[#allocation7 + $0xbc] sm:$0xf]
        %v1116 = vlaneseq
        %v1117 = vshrl.u32 %v1116, 7
        %v1118 = vsub.s32 3, %v1117
        %v1119 = vrot.slane %v408, %v1118
        %v1168 = vunpack.c.l.b16 %v1068
        %v1169 = vunpack.c.l.b16 %v1069
        %v1170 = vunpack.c.l.b16 %v1070
        %v1171 = vunpack.c.l.b16 %v1071
        %v1172 = vunpack.c.l.b16 %v1072
        %v1173 = vunpack.c.l.b16 %v1073
        %v1174 = vunpack.c.l.b16 %v1074
        %v1175 = vunpack.c.l.b16 %v1075
        %v1176 = vunpack.c.l.b16 %v1076
        %v1177 = vunpack.c.l.b16 %v1077
        %v1178 = vunpack.c.l.b16 %v1078
        %v1179 = vunpack.c.l.b16 %v1079
        %v1180 = vunpack.c.l.b16 %v1080
        %v1181 = vunpack.c.l.b16 %v1081
        %v1182 = vunpack.c.l.b16 %v1082
        %v1183 = vunpack.c.l.b16 %v1083
        %v1184 = vunpack.c.l.b16 %v1084
        %v1185 = vunpack.c.l.b16 %v1085
        %v1186 = vunpack.c.l.b16 %v1086
        %v1187 = vunpack.c.l.b16 %v1087
        %v1188 = vunpack.c.l.b16 %v1088
        %v1189 = vunpack.c.l.b16 %v1089
        %v1190 = vunpack.c.l.b16 %v1090
        %v1191 = vunpack.c.l.b16 %v1091
        %v1192 = vunpack.c.l.b16 %v1092
        %v1193 = vunpack.c.l.b16 %v1093
        %v1194 = vunpack.c.l.b16 %v1094
        %v1195 = vunpack.c.l.b16 %v1095
        %v1196 = vunpack.c.l.b16 %v1096
        %v1197 = vunpack.c.l.b16 %v1097
        %v1198 = vunpack.c.l.b16 %v1098
        %v1199 = vunpack.c.l.b16 %v1099
        %v1200 = vunpack.c.l.b16 %v1100
        %v1201 = vunpack.c.l.b16 %v1101
        %v1202 = vunpack.c.l.b16 %v1102
        %v1203 = vunpack.c.l.b16 %v1103
        %v1204 = vunpack.c.l.b16 %v1104
        %v1205 = vunpack.c.l.b16 %v1105
        %v1206 = vunpack.c.l.b16 %v1106
        %v1207 = vunpack.c.l.b16 %v1107
        %v1208 = vunpack.c.l.b16 %v1108
        %v1209 = vunpack.c.l.b16 %v1109
        %v1210 = vunpack.c.l.b16 %v1110
        %v1211 = vunpack.c.l.b16 %v1111
        %v1212 = vunpack.c.l.b16 %v1112
        %v1213 = vunpack.c.l.b16 %v1113
        %v1214 = vunpack.c.l.b16 %v1114
        %v1215 = vunpack.c.l.b16 %v1115
        %v1216 = vpack.c.b16 %v1169, %v1168
        %v1217 = vpack.c.b16 %v1171, %v1170
        %v1218 = vpack.c.b16 %v1173, %v1172
        %v1219 = vpack.c.b16 %v1175, %v1174
        %v1220 = vpack.c.b16 %v1177, %v1176
        %v1221 = vpack.c.b16 %v1179, %v1178
        %v1222 = vpack.c.b16 %v1181, %v1180
        %v1223 = vpack.c.b16 %v1183, %v1182
        %v1224 = vpack.c.b16 %v1185, %v1184
        %v1225 = vpack.c.b16 %v1187, %v1186
        %v1226 = vpack.c.b16 %v1189, %v1188
        %v1227 = vpack.c.b16 %v1191, %v1190
        %v1228 = vpack.c.b16 %v1193, %v1192
        %v1229 = vpack.c.b16 %v1195, %v1194
        %v1230 = vpack.c.b16 %v1197, %v1196
        %v1231 = vpack.c.b16 %v1199, %v1198
        %v1232 = vpack.c.b16 %v1201, %v1200
        %v1233 = vpack.c.b16 %v1203, %v1202
        %v1234 = vpack.c.b16 %v1205, %v1204
        %v1235 = vpack.c.b16 %v1207, %v1206
        %v1236 = vpack.c.b16 %v1209, %v1208
        %v1237 = vpack.c.b16 %v1211, %v1210
        %v1238 = vpack.c.b16 %v1213, %v1212
        %v1239 = vpack.c.b16 %v1215, %v1214
        %1264 = vmatprep.subr.bf16.mxu0 0
        %1265 = vmatpush1.bf16.msra.mxu0 %v1223
        %1266 = vmatprep.subr.bf16.mxu0 0
        %1267 = vmatpush1.bf16.msra.mxu0 %v1222
        %1268 = vmatprep.subr.bf16.mxu0 0
        %1269 = vmatpush1.bf16.msra.mxu0 %v1221
        %1270 = vmatprep.subr.bf16.mxu0 0
        %1271 = vmatpush1.bf16.msra.mxu0 %v1220
        %1272 = vmatprep.subr.bf16.mxu0 0
        %1273 = vmatpush1.bf16.msra.mxu0 %v1219
        %1274 = vmatprep.subr.bf16.mxu0 0
        %1275 = vmatpush1.bf16.msra.mxu0 %v1218
        %1276 = vmatprep.subr.bf16.mxu0 0
        %1277 = vmatpush1.bf16.msra.mxu0 %v1217
        %1278 = vmatprep.subr.bf16.mxu0 0
        %1279 = vmatpush1.bf16.msra.mxu0 %v1216
        %1280 = vmatprep.subr.bf16.mxu0 0
        %1281 = vmatpush2.bf16.msra.mxu0 %v1231
        %1282 = vmatprep.subr.bf16.mxu0 0
        %1283 = vmatpush2.bf16.msra.mxu0 %v1230
        %1284 = vmatprep.subr.bf16.mxu0 0
        %1285 = vmatpush2.bf16.msra.mxu0 %v1229
        %1286 = vmatprep.subr.bf16.mxu0 0
        %1287 = vmatpush2.bf16.msra.mxu0 %v1228
        %1288 = vmatprep.subr.bf16.mxu0 0
        %1289 = vmatpush2.bf16.msra.mxu0 %v1227
        %1290 = vmatprep.subr.bf16.mxu0 0
        %1291 = vmatpush2.bf16.msra.mxu0 %v1226
        %1292 = vmatprep.subr.bf16.mxu0 0
        %1293 = vmatpush2.bf16.msra.mxu0 %v1225
        %1294 = vmatprep.subr.bf16.mxu0 0
        %1295 = vmatpush2.bf16.msra.mxu0 %v1224
        %1296 = vmatprep.mubr.bf16.mxu0 %v1060
        %1297 = vmatmul.mubr.bf16.gmra.mxu0 %v1059
        %v1298 = vpop.f32.mrf.mxu0
        %v1299 = vadd.f32 %v1119, %v1298
        %v1300 = vpop.f32.mrf.mxu0
        %v1301 = vpop.f32.mrf.mxu0
        %v1302 = vadd.f32 %v1119, %v1301
        %v1303 = vpop.f32.mrf.mxu0
        %1304 = vdwg.mxu0
        %1305 = vmatprep.subr.bf16.mxu0 0
        %1306 = vmatpush1.bf16.msra.mxu0 %v1239
        %1307 = vmatprep.subr.bf16.mxu0 0
        %1308 = vmatpush1.bf16.msra.mxu0 %v1238
        %1309 = vmatprep.subr.bf16.mxu0 0
        %1310 = vmatpush1.bf16.msra.mxu0 %v1237
        %1311 = vmatprep.subr.bf16.mxu0 0
        %1312 = vmatpush1.bf16.msra.mxu0 %v1236
        %1313 = vmatprep.subr.bf16.mxu0 0
        %1314 = vmatpush1.bf16.msra.mxu0 %v1235
        %1315 = vmatprep.subr.bf16.mxu0 0
        %1316 = vmatpush1.bf16.msra.mxu0 %v1234
        %1317 = vmatprep.subr.bf16.mxu0 0
        %1318 = vmatpush1.bf16.msra.mxu0 %v1233
        %1319 = vmatprep.subr.bf16.mxu0 0
        %1320 = vmatpush1.bf16.msra.mxu0 %v1232
        %1321 = vmatprep.subr.bf16.mxu0 0
        %1322 = vmatpush2.bf16.msra.mxu0 0
        %1323 = vmatprep.subr.bf16.mxu0 0
        %1324 = vmatpush2.bf16.msra.mxu0 0
        %1325 = vmatprep.subr.bf16.mxu0 0
        %1326 = vmatpush2.bf16.msra.mxu0 0
        %1327 = vmatprep.subr.bf16.mxu0 0
        %1328 = vmatpush2.bf16.msra.mxu0 0
        %1329 = vmatprep.subr.bf16.mxu0 0
        %1330 = vmatpush2.bf16.msra.mxu0 0
        %1331 = vmatprep.subr.bf16.mxu0 0
        %1332 = vmatpush2.bf16.msra.mxu0 0
        %1333 = vmatprep.subr.bf16.mxu0 0
        %1334 = vmatpush2.bf16.msra.mxu0 0
        %1335 = vmatprep.subr.bf16.mxu0 0
        %1336 = vmatpush2.bf16.msra.mxu0 0
        %1337 = vmatprep.mubr.bf16.mxu0 0
        %1338 = vmatmul.mubr.bf16.gmra.mxu0 %v1067
        %v1339 = vpop.f32.mrf.mxu0
        %v1340 = vadd.f32 %v1299, %v1339
        %v1341 = vpop.f32.mrf.mxu0
        %v1342 = vpop.f32.mrf.mxu0
        %v1343 = vadd.f32 %v1302, %v1342
        %v1344 = vpop.f32.mrf.mxu0
        %1345 = vdwg.mxu0
        %v1346 = vadd.f32 %v1340, %v1343
        %v1347 = vrot.slane %v1346, 4
        %v1348 = vadd.f32 %v1346, %v1347
        %v1349 = vrot.slane %v1348, 2
        %v1350 = vadd.f32 %v1348, %v1349
        %v1351 = vrot.slane %v1350, 1
        %v1352 = vadd.f32 %v1350, %v1351
        %v1353 = vmul.f32 %v1340, %v1340
        %v1354 = vmul.f32 %v1343, %v1343
        %v1355 = vadd.f32 %v1353, %v1354
        %v1356 = vrot.slane %v1355, 4
        %v1357 = vadd.f32 %v1355, %v1356
        %v1358 = vrot.slane %v1357, 2
        %v1359 = vadd.f32 %v1357, %v1358
        %v1360 = vrot.slane %v1359, 1
        %v1361 = vadd.f32 %v1359, %v1360
        %v1362 = vsel %vm755, %v1352, %v1361
        %1363 = vmatprep.subr.mxu0 0.0
        %1364 = vmatpush1.msra.mxu0 %v425
        %1365 = vmatprep.subr.mxu0 0.0
        %1366 = vmatpush1.msra.mxu0 %v424
        %1367 = vmatprep.subr.mxu0 0.0
        %1368 = vmatpush1.msra.mxu0 %v423
        %1369 = vmatprep.subr.mxu0 0.0
        %1370 = vmatpush1.msra.mxu0 %v422
        %1371 = vmatprep.subr.mxu0 0.0
        %1372 = vmatpush1.msra.mxu0 %v421
        %1373 = vmatprep.subr.mxu0 0.0
        %1374 = vmatpush1.msra.mxu0 %v420
        %1375 = vmatprep.subr.mxu0 0.0
        %1376 = vmatpush1.msra.mxu0 %v419
        %1377 = vmatprep.subr.mxu0 0.0
        %1378 = vmatpush1.msra.mxu0 %v418
        %1379 = vmatprep.subr.mxu0 0.0
        %1380 = vmatpush1.msra.mxu0 %v417
        %1381 = vmatprep.subr.mxu0 0.0
        %1382 = vmatpush1.msra.mxu0 %v416
        %1383 = vmatprep.subr.mxu0 0.0
        %1384 = vmatpush1.msra.mxu0 %v415
        %1385 = vmatprep.subr.mxu0 0.0
        %1386 = vmatpush1.msra.mxu0 %v414
        %1387 = vmatprep.subr.mxu0 0.0
        %1388 = vmatpush1.msra.mxu0 %v413
        %1389 = vmatprep.subr.mxu0 0.0
        %1390 = vmatpush1.msra.mxu0 %v412
        %1391 = vmatprep.subr.mxu0 0.0
        %1392 = vmatpush1.msra.mxu0 %v411
        %1393 = vmatprep.subr.mxu0 0.0
        %1394 = vmatpush1.msra.mxu0 %v410
        %1395 = vmatprep.subr.mxu0 0.0
        %1396 = vmatpush2.msra.mxu0 0.0
        %1397 = vmatprep.subr.mxu0 0.0
        %1398 = vmatpush2.msra.mxu0 0.0
        %1399 = vmatprep.subr.mxu0 0.0
        %1400 = vmatpush2.msra.mxu0 0.0
        %1401 = vmatprep.subr.mxu0 0.0
        %1402 = vmatpush2.msra.mxu0 0.0
        %1403 = vmatprep.subr.mxu0 0.0
        %1404 = vmatpush2.msra.mxu0 0.0
        %1405 = vmatprep.subr.mxu0 0.0
        %1406 = vmatpush2.msra.mxu0 0.0
        %1407 = vmatprep.subr.mxu0 0.0
        %1408 = vmatpush2.msra.mxu0 0.0
        %1409 = vmatprep.subr.mxu0 0.0
        %1410 = vmatpush2.msra.mxu0 0.0
        %1411 = vmatprep.subr.mxu0 0.0
        %1412 = vmatpush2.msra.mxu0 0.0
        %1413 = vmatprep.subr.mxu0 0.0
        %1414 = vmatpush2.msra.mxu0 0.0
        %1415 = vmatprep.subr.mxu0 0.0
        %1416 = vmatpush2.msra.mxu0 0.0
        %1417 = vmatprep.subr.mxu0 0.0
        %1418 = vmatpush2.msra.mxu0 0.0
        %1419 = vmatprep.subr.mxu0 0.0
        %1420 = vmatpush2.msra.mxu0 0.0
        %1421 = vmatprep.subr.mxu0 0.0
        %1422 = vmatpush2.msra.mxu0 0.0
        %1423 = vmatprep.subr.mxu0 0.0
        %1424 = vmatpush2.msra.mxu0 0.0
        %1425 = vmatprep.subr.mxu0 0.0
        %1426 = vmatpush2.msra.mxu0 0.0
        %1427 = vmatprep.mubr.f32.mxu0 0.0
        %1428 = vmatmul.mubr.f32.gmra.mxu0 %v1362
        %v1429 = vpop.f32.mrf.mxu0
        %v1430 = vadd.f32 0.0, %v1429
        %v1431 = vpop.f32.mrf.mxu0
        %1432 = vdwg.mxu0
        %v1433 = vmul.f32 %v1430, 0.015625
        %v1434 = vmul.f32 %v1433, %v1433
        %v1436 = vrot.slane %v1434, 7
        %v1438 = vsub.f32 %v1433, %v1436
        %v1439 = vmax.f32 %v1438, 0.0
        %v1440 = vsel %vm755, %v1433, %v1439
        %v1442 = vsel %vm835, %v1440, 0
        %1444 = vmatprep.subr.mxu0 0.0
        %1445 = vmatpush1.msra.mxu0 0.0
        %1446 = vmatprep.subr.mxu0 0.0
        %1447 = vmatpush1.msra.mxu0 0.0
        %1448 = vmatprep.subr.mxu0 0.0
        %1449 = vmatpush1.msra.mxu0 0.0
        %1450 = vmatprep.subr.mxu0 0.0
        %1451 = vmatpush1.msra.mxu0 0.0
        %1452 = vmatprep.subr.mxu0 0.0
        %1453 = vmatpush1.msra.mxu0 0.0
        %1454 = vmatprep.subr.mxu0 0.0
        %1455 = vmatpush1.msra.mxu0 0.0
        %1456 = vmatprep.subr.mxu0 0.0
        %1457 = vmatpush1.msra.mxu0 0.0
        %1458 = vmatprep.subr.mxu0 0.0
        %1459 = vmatpush1.msra.mxu0 0.0
        %1460 = vmatprep.subr.mxu0 0.0
        %1461 = vmatpush1.msra.mxu0 0.0
        %1462 = vmatprep.subr.mxu0 0.0
        %1463 = vmatpush1.msra.mxu0 0.0
        %1464 = vmatprep.subr.mxu0 0.0
        %1465 = vmatpush1.msra.mxu0 0.0
        %1466 = vmatprep.subr.mxu0 0.0
        %1467 = vmatpush1.msra.mxu0 0.0
        %1468 = vmatprep.subr.mxu0 0.0
        %1469 = vmatpush1.msra.mxu0 0.0
        %1470 = vmatprep.subr.mxu0 0.0
        %1471 = vmatpush1.msra.mxu0 0.0
        %1472 = vmatprep.subr.mxu0 0.0
        %1473 = vmatpush1.msra.mxu0 0.0
        %1474 = vmatprep.subr.mxu0 0.0
        %1475 = vmatpush1.msra.mxu0 %v841
        %1476 = vmatprep.subr.mxu0 0.0
        %1477 = vmatpush2.msra.mxu0 0.0
        %1478 = vmatprep.subr.mxu0 0.0
        %1479 = vmatpush2.msra.mxu0 0.0
        %1480 = vmatprep.subr.mxu0 0.0
        %1481 = vmatpush2.msra.mxu0 0.0
        %1482 = vmatprep.subr.mxu0 0.0
        %1483 = vmatpush2.msra.mxu0 0.0
        %1484 = vmatprep.subr.mxu0 0.0
        %1485 = vmatpush2.msra.mxu0 0.0
        %1486 = vmatprep.subr.mxu0 0.0
        %1487 = vmatpush2.msra.mxu0 0.0
        %1488 = vmatprep.subr.mxu0 0.0
        %1489 = vmatpush2.msra.mxu0 0.0
        %1490 = vmatprep.subr.mxu0 0.0
        %1491 = vmatpush2.msra.mxu0 0.0
        %1492 = vmatprep.subr.mxu0 0.0
        %1493 = vmatpush2.msra.mxu0 0.0
        %1494 = vmatprep.subr.mxu0 0.0
        %1495 = vmatpush2.msra.mxu0 0.0
        %1496 = vmatprep.subr.mxu0 0.0
        %1497 = vmatpush2.msra.mxu0 0.0
        %1498 = vmatprep.subr.mxu0 0.0
        %1499 = vmatpush2.msra.mxu0 0.0
        %1500 = vmatprep.subr.mxu0 0.0
        %1501 = vmatpush2.msra.mxu0 0.0
        %1502 = vmatprep.subr.mxu0 0.0
        %1503 = vmatpush2.msra.mxu0 0.0
        %1504 = vmatprep.subr.mxu0 0.0
        %1505 = vmatpush2.msra.mxu0 0.0
        %1506 = vmatprep.subr.mxu0 0.0
        %1507 = vmatpush2.msra.mxu0 0.0
        %1508 = vmatprep.mubr.f32.mxu0 0.0
        %1509 = vmatmul.mubr.f32.gmra.mxu0 %v1442
        %v1510 = vpop.f32.mrf.mxu0
        %v1511 = vadd.f32 0.0, %v1510
        %v1512 = vpop.f32.mrf.mxu0
        %1513 = vdwg.mxu0
        %v1514 = vadd.f32 %v1511, 1e-05
        %v1515 = vrsqrt.pop %v1514
        %v1516 = vrot.slane %v408, 3
        %v1518 = vmul.f32 %v1515, %v1516
        %v1520 = vrot.slane %v1518, 1
        %v1522 = vmul.f32 %v1511, %v1520
        %v1524 = vrot.slane %v1522, 3
        %v1526 = vsub.f32 %v408, %v1524
        %v1527 = vlaneseq
        %v1528 = vshrl.u32 %v1527, 7
        %v1529 = vsub.s32 1, %v1528
        %v1530 = vrot.slane %v1518, %v1529
        %v1531 = vmul.f32 %v1340, %v1530
        %v1532 = vmul.f32 %v1343, %v1530
        %v1533 = vlaneseq
        %v1534 = vshrl.u32 %v1533, 7
        %v1535 = vsub.s32 5, %v1534
        %v1536 = vrot.slane %v1526, %v1535
        %v1537 = vadd.f32 %v1531, %v1536
        %v1538 = vadd.f32 %v1532, %v1536
        %v1539 = vmin.f32 %v1537, 20.0
        %v1540 = vmin.f32 %v1538, 20.0
        %v1541 = vmul.f32 %v1539, 1.442695
        %v1542 = vpow.pop %v1541
        %v1543 = vmul.f32 %v1540, 1.442695
        %v1544 = vpow.pop %v1543
        %v1545 = vadd.f32 %v1542, 2.0
        %v1546 = vadd.f32 %v1544, 2.0
        %v1547 = vmul.f32 %v1542, %v1545
        %v1548 = vmul.f32 %v1544, %v1546
        %v1549 = vadd.f32 %v1547, 2.0
        %v1550 = vadd.f32 %v1548, 2.0
        %v1551 = vrcp.pop %v1549
        %v1552 = vrcp.pop %v1550
        %v1553 = vmul.f32 %v1547, %v1551
        %v1554 = vmul.f32 %v1548, %v1552
        %v1555 = vmul.f32 %v1537, %v1553
        %v1556 = vmul.f32 %v1538, %v1554
        %v1557 = vld [vmem:[%s4] sm:$0xf]
        %v1558 = vld [vmem:[%s4 + $0x4] sm:$0xf]
        %v1559 = vld [vmem:[%s4 + $0x8] sm:$0xf]
        %v1560 = vld [vmem:[%s4 + $0xc] sm:$0xf]
        %v1561 = vld [vmem:[%s4 + $0x10] sm:$0xf]
        %v1562 = vld [vmem:[%s4 + $0x14] sm:$0xf]
        %v1563 = vld [vmem:[%s4 + $0x18] sm:$0xf]
        %v1564 = vld [vmem:[%s4 + $0x1c] sm:$0xf]
        %v1565 = vld [vmem:[%s4 + $0x20] sm:$0xf]
        %v1566 = vld [vmem:[%s4 + $0x24] sm:$0xf]
        %v1567 = vld [vmem:[%s4 + $0x28] sm:$0xf]
        %v1568 = vld [vmem:[%s4 + $0x2c] sm:$0xf]
        %v1569 = vld [vmem:[%s4 + $0x30] sm:$0xf]
        %v1570 = vld [vmem:[%s4 + $0x34] sm:$0xf]
        %v1571 = vld [vmem:[%s4 + $0x38] sm:$0xf]
        %v1572 = vld [vmem:[%s4 + $0x3c] sm:$0xf]
        %v1573 = vlaneseq
        %v1574 = vshrl.u32 %v1573, 7
        %v1575 = vsub.s32 0, %v1574
        %v1576 = vrot.slane %v409, %v1575
        %v1593 = vunpack.c.l.b16 %v1557
        %v1594 = vunpack.c.l.b16 %v1558
        %v1595 = vunpack.c.l.b16 %v1559
        %v1596 = vunpack.c.l.b16 %v1560
        %v1597 = vunpack.c.l.b16 %v1561
        %v1598 = vunpack.c.l.b16 %v1562
        %v1599 = vunpack.c.l.b16 %v1563
        %v1600 = vunpack.c.l.b16 %v1564
        %v1601 = vunpack.c.l.b16 %v1565
        %v1602 = vunpack.c.l.b16 %v1566
        %v1603 = vunpack.c.l.b16 %v1567
        %v1604 = vunpack.c.l.b16 %v1568
        %v1605 = vunpack.c.l.b16 %v1569
        %v1606 = vunpack.c.l.b16 %v1570
        %v1607 = vunpack.c.l.b16 %v1571
        %v1608 = vunpack.c.l.b16 %v1572
        %v1609 = vpack.c.b16 %v1594, %v1593
        %v1610 = vpack.c.b16 %v1596, %v1595
        %v1611 = vpack.c.b16 %v1598, %v1597
        %v1612 = vpack.c.b16 %v1600, %v1599
        %v1613 = vpack.c.b16 %v1602, %v1601
        %v1614 = vpack.c.b16 %v1604, %v1603
        %v1615 = vpack.c.b16 %v1606, %v1605
        %v1616 = vpack.c.b16 %v1608, %v1607
        %1625 = vmatprep.subr.bf16.mxu0 0
        %1626 = vmatpush1.bf16.msra.mxu0 %v1616
        %1627 = vmatprep.subr.bf16.mxu0 0
        %1628 = vmatpush1.bf16.msra.mxu0 %v1615
        %1629 = vmatprep.subr.bf16.mxu0 0
        %1630 = vmatpush1.bf16.msra.mxu0 %v1614
        %1631 = vmatprep.subr.bf16.mxu0 0
        %1632 = vmatpush1.bf16.msra.mxu0 %v1613
        %1633 = vmatprep.subr.bf16.mxu0 0
        %1634 = vmatpush1.bf16.msra.mxu0 %v1612
        %1635 = vmatprep.subr.bf16.mxu0 0
        %1636 = vmatpush1.bf16.msra.mxu0 %v1611
        %1637 = vmatprep.subr.bf16.mxu0 0
        %1638 = vmatpush1.bf16.msra.mxu0 %v1610
        %1639 = vmatprep.subr.bf16.mxu0 0
        %1640 = vmatpush1.bf16.msra.mxu0 %v1609
        %1641 = vmatprep.subr.bf16.mxu0 0
        %1642 = vmatpush2.bf16.msra.mxu0 0
        %1643 = vmatprep.subr.bf16.mxu0 0
        %1644 = vmatpush2.bf16.msra.mxu0 0
        %1645 = vmatprep.subr.bf16.mxu0 0
        %1646 = vmatpush2.bf16.msra.mxu0 0
        %1647 = vmatprep.subr.bf16.mxu0 0
        %1648 = vmatpush2.bf16.msra.mxu0 0
        %1649 = vmatprep.subr.bf16.mxu0 0
        %1650 = vmatpush2.bf16.msra.mxu0 0
        %1651 = vmatprep.subr.bf16.mxu0 0
        %1652 = vmatpush2.bf16.msra.mxu0 0
        %1653 = vmatprep.subr.bf16.mxu0 0
        %1654 = vmatpush2.bf16.msra.mxu0 0
        %1655 = vmatprep.subr.bf16.mxu0 0
        %1656 = vmatpush2.bf16.msra.mxu0 0
        %1657 = vmatprep.mubr.bf16.mxu0 0
        %1658 = vmatmul.mubr.bf16.gmra.mxu0 %v446
        %v1659 = vpop.f32.mrf.mxu0
        %v1660 = vadd.f32 %v1576, %v1659
        %v1661 = vpop.f32.mrf.mxu0
        %v1662 = vpop.f32.mrf.mxu0
        %v1663 = vadd.f32 %v1576, %v1662
        %v1664 = vpop.f32.mrf.mxu0
        %1665 = vdwg.mxu0
        %v1666 = vadd.f32 %v1555, %v1660
        %v1667 = vadd.f32 %v1556, %v1663
        %1668 = vst [vmem:[%s401] sm:$0xff] %v1666
        %1669 = vst [vmem:[%s401 + $0x8] sm:$0xff] %v1667
        %s1670 = sand.u32 %s235, 1
        %s1671 = scalar_lea.sflag [#allocation4], %s1670
        %s1672 = sand.u32 %s235, 1
        %s1673 = smul.addr %s1672, 16
        %s1674 = scalar_lea.vmem [#allocation10], %s1673
        // Predicated region
        $region73: #{tpu_custom_call.1} parent=55 // pred_check
          %p1675 = pneg %p245
        $region74: #{tpu_custom_call.1} parent=55 // pred_check_branch
          %1677 = sbr.rel (%p1675) target = $region76
        $region75: #{tpu_custom_call.1} parent=55 // pred_region
          %s1679 = ssub.s32 256, 256
          %1680 = vsyncadd %s1671, %s1679
          %s1681 = smul.addr %s28, 2
          %s1682 = smul.addr %s1681, 128
          %s1683 = scalar_lea.hbm %s9, %s1682
          %s1684 = sshll.u32 %s1674, 4
          %s1685 = int_to_ptr.vmem [resolvable:$true] %s1684
          %1690 = dma.vmem_to_hbm [thread:$0]  %s1685, 256, %s1683, %s1671, 128, 128, 8
        $region76: #{tpu_custom_call.1} parent=55 // pred_fallthru
          _
      $region56: #{tpu_custom_call.1} parent=5 // pred_fallthru
        _
      %p1691 = scmp.le.s32.totalorder 2, %s23
      // Predicated region
      $region77: #{tpu_custom_call.1} parent=5 // pred_check
        %p1692 = pneg %p1691
      $region78: #{tpu_custom_call.1} parent=5 // pred_check_branch
        %1694 = sbr.rel (%p1692) target = $region80
      $region79: #{tpu_custom_call.1} parent=5 // pred_region
        %s1695 = ssub.s32 %s23, 2
        // Predicated region
        $region81: #{tpu_custom_call.1} parent=79 // pred_check
          %p1696 = pneg %p251
        $region82: #{tpu_custom_call.1} parent=79 // pred_check_branch
          %1698 = sbr.rel (%p1696) target = $region84
        $region83: #{tpu_custom_call.1} parent=79 // pred_region
          %s1699 = sand.u32 %s236, 1
          %s1700 = scalar_lea.sflag [#allocation4], %s1699
          %s1701 = sand.u32 %s236, 1
          %s1702 = smul.addr %s1701, 16
          %s1703 = scalar_lea.vmem [#allocation10], %s1702
          %1704 = dma.done %s1700, 256
        $region84: #{tpu_custom_call.1} parent=79 // pred_fallthru
          _
      $region80: #{tpu_custom_call.1} parent=5 // pred_fallthru
        _
    $region6: #{tpu_custom_call.1} parent=1 // loop_footer
      %s27 = sadd.s32 1, %s23
    $region7: #{tpu_custom_call.1} parent=1 // loop_footer_branch
      %22 = sbr.rel target = $region3
    $region8: #{tpu_custom_call.1} parent=1 // loop_exit
      _
    %1705 = vsyncpa [#allocation3], 1
    %s1706 = scalar_lea.sflag [#allocation3], 1
    %1707 = vsyncpa %s1706, 1
    %1708 = vsyncpa [#allocation6], 1
    %1709 = vsyncpa [#allocation9], 1
    %1710 = vsyncpa [#allocation4], 1
    %s1711 = scalar_lea.sflag [#allocation4], 1
    %1712 = vsyncpa %s1711, 1

</llo_original>
